<compile_context>
chip_gen: v7x
topology: tpu7x:2x2x1
jax: 0.10.0
libtpu: 0.0.40
codegen_flags: <defaults>
</compile_context>

<pallas_src>
import functools
import math

import jax
import jax.numpy as jnp
from jax import lax
from jax.experimental import pallas as pl
from jax.experimental.pallas import tpu as pltpu

NUM_LABELS = 2


# --------------------------------------------------------------------------
# Shared in-kernel helpers
# --------------------------------------------------------------------------
def _layer_norm(x, g, b, eps=1e-5):
    mu = jnp.mean(x, axis=-1, keepdims=True)
    var = jnp.mean((x - mu) ** 2, axis=-1, keepdims=True)
    return (x - mu) * lax.rsqrt(var + eps) * g + b


def _logaddexp2(a, b):
    # 2-state log-sum-exp: one exp + one log per call (vs 2 exp + 1 log).
    m = jnp.maximum(a, b)
    return m + jnp.log(1.0 + jnp.exp(-jnp.abs(a - b)))


def _encoder_emissions(x_ref, mask_ref, w, lin_w_ref, lin_b_ref, seed_ref,
                       *, num_layers, train, dropout_p):
    """Transformer encoder + dropout + emission projection, fully in VMEM.

    Returns em0, em1 (per-label emissions, (B, S) f32), mask_i, mask_f.
    """
    (wqkv_ref, bqkv_ref, wo_ref, bo_ref, g1_ref, c1_ref,
     w1_ref, d1_ref, w2_ref, d2_ref, g2_ref, c2_ref) = w

    x = x_ref[...]                                        # (B, S, H) f32
    B, S, H = x.shape
    mask_i = mask_ref[...]                                # (B, S) int32
    mask_f = mask_i.astype(jnp.float32)
    # Hoisted out of the layer loop: broadcast once to full (B, S, S).
    key_bias = jnp.broadcast_to(((1.0 - mask_f) * (-1e9))[:, None, :],
                                (B, S, S))                # (B, S, S) f32
    inv_sqrt_h = 1.0 / math.sqrt(H)

    h = x.reshape(B * S, H)                               # fold batch, f32

    for l in range(num_layers):                           # static unroll
        hb = h.astype(jnp.bfloat16)
        # Fused QKV projection: one (B*S, H) @ (H, 3H) MXU pass.
        qkv = jnp.dot(hb, wqkv_ref[l],
                      preferred_element_type=jnp.float32) + bqkv_ref[l]
        q3 = qkv[:, 0:H].reshape(B, S, H).astype(jnp.bfloat16)
        k3 = qkv[:, H:2 * H].reshape(B, S, H).astype(jnp.bfloat16)
        v3 = qkv[:, 2 * H:3 * H].reshape(B, S, H).astype(jnp.bfloat16)

        # batched q @ k^T: contract last dims of both (no explicit transpose)
        s = jnp.einsum('bqd,bkd->bqk', q3, k3,
                       preferred_element_type=jnp.float32)
        s = s * inv_sqrt_h + key_bias                      # mask bias in f32
        s = s - jnp.max(s, axis=-1, keepdims=True)
        p = jnp.exp(s)
        p = p / jnp.sum(p, axis=-1, keepdims=True)         # exact softmax
        a = jnp.einsum('bqk,bkd->bqd', p.astype(jnp.bfloat16), v3,
                       preferred_element_type=jnp.float32)

        o = jnp.dot(a.reshape(B * S, H).astype(jnp.bfloat16), wo_ref[l],
                    preferred_element_type=jnp.float32) + bo_ref[l]
        h1 = _layer_norm(h + o, g1_ref[l], c1_ref[l])      # f32

        f = jnp.dot(h1.astype(jnp.bfloat16), w1_ref[l],
                    preferred_element_type=jnp.float32) + d1_ref[l]
        f = jax.nn.gelu(f, approximate=True)
        y = jnp.dot(f.astype(jnp.bfloat16), w2_ref[l],
                    preferred_element_type=jnp.float32) + d2_ref[l]
        h = _layer_norm(h1 + y, g2_ref[l], c2_ref[l])

    # nn.Dropout (identity in eval mode); seed is a runtime SMEM scalar.
    if train:
        pltpu.prng_seed(seed_ref[0])
        bits = pltpu.prng_random_bits(h.shape)             # uint32
        thresh = jnp.uint32(int(dropout_p * 4294967296.0))
        h = jnp.where(bits >= thresh, h * (1.0 / (1.0 - dropout_p)), 0.0)

    # Emission projection as two lane reductions (no N=2 MXU pass, no
    # lane-sparse (B, S, 2) tensor); nn.Linear weight layout is (L, H).
    # lin_w stays f32: it feeds VPU lane reductions, not the MXU.
    h3 = h.reshape(B, S, H)
    w0 = lin_w_ref[0:1, :]                                 # (1, H)
    w1r = lin_w_ref[1:2, :]
    em0 = jnp.sum(h3 * w0, axis=-1) + lin_b_ref[0]         # (B, S)
    em1 = jnp.sum(h3 * w1r, axis=-1) + lin_b_ref[1]
    return em0, em1, mask_i, mask_f


# --------------------------------------------------------------------------
# Fused forward kernels (decode path / loss path)
# --------------------------------------------------------------------------
def fused_decode_kernel(seed_ref, lin_b_ref, start_ref, end_ref, trans_ref,
                        x_ref, mask_ref,
                        wqkv_ref, bqkv_ref, wo_ref, bo_ref,
                        g1_ref, c1_ref, w1_ref, d1_ref, w2_ref, d2_ref,
                        g2_ref, c2_ref, lin_w_ref,
                        tags_ref, *, num_layers, train, dropout_p):
    em0, em1, mask_i, mask_f = _encoder_emissions(
        x_ref, mask_ref,
        (wqkv_ref, bqkv_ref, wo_ref, bo_ref, g1_ref, c1_ref,
         w1_ref, d1_ref, w2_ref, d2_ref, g2_ref, c2_ref),
        lin_w_ref, lin_b_ref, seed_ref,
        num_layers=num_layers, train=train, dropout_p=dropout_p)

    B, S = em0.shape
    s0 = start_ref[0]; s1 = start_ref[1]
    e0 = end_ref[0];   e1 = end_ref[1]
    t00 = trans_ref[0]; t01 = trans_ref[1]
    t10 = trans_ref[2]; t11 = trans_ref[3]

    seq_len = jnp.sum(mask_i, axis=1, keepdims=True)        # (B, 1)
    seq_end = jnp.maximum(seq_len - 1, 0)                   # guard len==0

    # ---- Viterbi forward: statically unrolled, static time slices ----
    # (fine for S <= 16; switch to a fori_loop + VMEM scratch for longer S)
    sc0 = s0 + em0[:, 0:1]
    sc1 = s1 + em1[:, 0:1]
    bp0 = [None] * S      # backpointer into step t given current label 0
    bp1 = [None] * S      # backpointer into step t given current label 1
    for t in range(1, S):
        et0 = em0[:, t:t + 1]
        et1 = em1[:, t:t + 1]
        mt = mask_f[:, t:t + 1] > 0.5
        c00 = sc0 + t00; c10 = sc1 + t10                    # into label 0
        c01 = sc0 + t01; c11 = sc1 + t11                    # into label 1
        n0 = jnp.maximum(c00, c10) + et0
        n1 = jnp.maximum(c01, c11) + et1
        bp0[t] = (c10 > c00).astype(jnp.int32)              # ties -> label 0
        bp1[t] = (c11 > c01).astype(jnp.int32)
        sc0 = jnp.where(mt, n0, sc0)
        sc1 = jnp.where(mt, n1, sc1)

    best_last = ((sc1 + e1) > (sc0 + e0)).astype(jnp.int32)  # (B, 1)

    # ---- backtrack + torchcrf-style last-tag padding (t >= seq_end) ----
    col = lax.broadcasted_iota(jnp.int32, (B, S), 1)
    tags = jnp.zeros((B, S), jnp.int32)
    nxt = best_last
    for t in range(S - 1, -1, -1):
        if t == S - 1:
            tag_t = best_last
        else:
            bp = jnp.where(nxt == 0, bp0[t + 1], bp1[t + 1])
            tag_t = jnp.where(t >= seq_end, best_last, bp)
        tags = tags + tag_t * (col == t).astype(jnp.int32)   # VPU scatter
        nxt = tag_t
    tags_ref[...] = tags


def fused_loss_kernel(seed_ref, lin_b_ref, start_ref, end_ref, trans_ref,
                      x_ref, mask_ref, labels_ref,
                      wqkv_ref, bqkv_ref, wo_ref, bo_ref,
                      g1_ref, c1_ref, w1_ref, d1_ref, w2_ref, d2_ref,
                      g2_ref, c2_ref, lin_w_ref,
                      loss_ref, *, num_layers, train, dropout_p):
    em0, em1, mask_i, mask_f = _encoder_emissions(
        x_ref, mask_ref,
        (wqkv_ref, bqkv_ref, wo_ref, bo_ref, g1_ref, c1_ref,
         w1_ref, d1_ref, w2_ref, d2_ref, g2_ref, c2_ref),
        lin_w_ref, lin_b_ref, seed_ref,
        num_layers=num_layers, train=train, dropout_p=dropout_p)

    B, S = em0.shape
    lab = labels_ref[...]                                   # (B, S) int32
    s0 = start_ref[0]; s1 = start_ref[1]
    e0 = end_ref[0];   e1 = end_ref[1]
    t00 = trans_ref[0]; t01 = trans_ref[1]
    t10 = trans_ref[2]; t11 = trans_ref[3]

    col = lax.broadcasted_iota(jnp.int32, (B, S), 1)
    seq_len = jnp.sum(mask_i, axis=1, keepdims=True)
    seq_end = jnp.maximum(seq_len - 1, 0)

    # ---- numerator: score of the gold tag sequence ----
    em_sel = jnp.where(lab == 0, em0, em1)                  # (B, S)
    start_sel = jnp.where(lab[:, 0:1] == 0, s0, s1)
    em_term = em_sel[:, 0:1] + jnp.sum(em_sel[:, 1:] * mask_f[:, 1:],
                                       axis=1, keepdims=True)
    prev = lab[:, :-1]
    cur = lab[:, 1:]
    tv = jnp.where(prev == 0,
                   jnp.where(cur == 0, t00, t01),
                   jnp.where(cur == 0, t10, t11))            # (B, S-1)
    trans_term = jnp.sum(tv * mask_f[:, 1:], axis=1, keepdims=True)
    last_tag = jnp.sum(lab * (col == seq_end).astype(jnp.int32),
                       axis=1, keepdims=True)
    end_sel = jnp.where(last_tag == 0, e0, e1)
    numerator = start_sel + em_term + trans_term + end_sel   # (B, 1)

    # ---- denominator: forward algorithm (log partition), unrolled ----
    a0 = s0 + em0[:, 0:1]
    a1 = s1 + em1[:, 0:1]
    for t in range(1, S):
        mt = mask_f[:, t:t + 1] > 0.5
        n0 = _logaddexp2(a0 + t00, a1 + t10) + em0[:, t:t + 1]
        n1 = _logaddexp2(a0 + t01, a1 + t11) + em1[:, t:t + 1]
        a0 = jnp.where(mt, n0, a0)
        a1 = jnp.where(mt, n1, a1)
    denom = _logaddexp2(a0 + e0, a1 + e1)                    # (B, 1)

    llh = numerator - denom
    # module returns -crf(...) with torchcrf default reduction='sum'
    # TODO(synk): a (1,)-SMEM scalar output would skip the 4-byte VMEM DMA;
    # kept in VMEM for lowering portability across chip generations.
    loss_ref[...] = -jnp.sum(llh, axis=0, keepdims=True)     # (1, 1)


# --------------------------------------------------------------------------
# Parameter init (deterministic, synthetic) and model wrapper
# --------------------------------------------------------------------------
def init_params(key, vocab=64, hidden=32, ffn=64, num_layers=2,
                max_seq=16, num_labels=NUM_LABELS):
    keys = iter(jax.random.split(key, 64))

    def nrm(shape, scale=0.02):
        return scale * jax.random.normal(next(keys), shape, dtype=jnp.float32)

    def zeros(shape):
        return jnp.zeros(shape, jnp.float32)

    def ones(shape):
        return jnp.ones(shape, jnp.float32)

    layers = []
    for _ in range(num_layers):
        layers.append(dict(
            wq=nrm((hidden, hidden)), bq=zeros((1, hidden)),
            wk=nrm((hidden, hidden)), bk=zeros((1, hidden)),
            wv=nrm((hidden, hidden)), bv=zeros((1, hidden)),
            wo=nrm((hidden, hidden)), bo=zeros((1, hidden)),
            ln1_g=ones((1, hidden)), ln1_b=zeros((1, hidden)),
            w1=nrm((hidden, ffn)), b1=zeros((1, ffn)),
            w2=nrm((ffn, hidden)), b2=zeros((1, hidden)),
            ln2_g=ones((1, hidden)), ln2_b=zeros((1, hidden)),
        ))

    return dict(
        tok_emb=nrm((vocab, hidden)),
        pos_emb=nrm((max_seq, hidden)),
        layers=layers,
        lin_w=nrm((num_labels, hidden)),      # nn.Linear(hidden, L).weight
        lin_b=zeros((num_labels,)),
        crf_start=nrm((num_labels,), scale=0.1),
        crf_end=nrm((num_labels,), scale=0.1),
        crf_trans=nrm((num_labels, num_labels), scale=0.1),
    )


class AutoModelCRFPallas:
    def __init__(self, params, dropout=0.1, train=False):
        self.params = params
        self.dropout = float(dropout)
        self.train = bool(train)
        self.num_layers = len(params["layers"])

        # Stack per-layer weights once; pre-cast matmul weights to bf16 and
        # fuse Q|K|V along the output dim so the kernel does a single wide
        # (H, 3H) MXU pass per layer.  Biases / LayerNorm params stay f32.
        Ls = params["layers"]
        bf = jnp.bfloat16
        self._stacked = (
            jnp.stack([jnp.concatenate([lp["wq"], lp["wk"], lp["wv"]], axis=1)
                       for lp in Ls]).astype(bf),                    # wqkv
            jnp.stack([jnp.concatenate([lp["bq"], lp["bk"], lp["bv"]], axis=1)
                       for lp in Ls]),                               # bqkv
            jnp.stack([lp["wo"] for lp in Ls]).astype(bf),
            jnp.stack([lp["bo"] for lp in Ls]),
            jnp.stack([lp["ln1_g"] for lp in Ls]),
            jnp.stack([lp["ln1_b"] for lp in Ls]),
            jnp.stack([lp["w1"] for lp in Ls]).astype(bf),
            jnp.stack([lp["b1"] for lp in Ls]),
            jnp.stack([lp["w2"] for lp in Ls]).astype(bf),
            jnp.stack([lp["b2"] for lp in Ls]),
            jnp.stack([lp["ln2_g"] for lp in Ls]),
            jnp.stack([lp["ln2_b"] for lp in Ls]),
        )

        # Compile-once entry points.  jax.jit caches per input shape; the
        # pallas_call is built inside the traced function so Mosaic lowering
        # happens exactly once per (B, S).  Weights are closed-over consts.
        self._decode_jit = jax.jit(self._decode_impl)
        self._loss_jit = jax.jit(self._loss_impl)

        self._smem_spec = pl.BlockSpec(memory_space=pltpu.MemorySpace.SMEM)
        self._vmem_spec = pl.BlockSpec(memory_space=pltpu.MemorySpace.VMEM)
        self._cparams = pltpu.CompilerParams(vmem_limit_bytes=32 * 1024 * 1024)

    # -- shared glue: embedding gather + SMEM scalar packing (inside jit) --
    def _prep(self, input_ids, attention_mask, seed):
        p = self.params
        B, S = input_ids.shape
        x = p["tok_emb"][input_ids] + p["pos_emb"][None, :S, :]
        mask = attention_mask.astype(jnp.int32)
        smem_in = (jnp.asarray(seed, jnp.int32).reshape(1),   # dropout seed
                   p["lin_b"].reshape(-1).astype(jnp.float32),
                   p["crf_start"].reshape(-1),
                   p["crf_end"].reshape(-1),
                   p["crf_trans"].reshape(-1))
        return smem_in, x, mask

    def _decode_impl(self, input_ids, attention_mask, seed):
        B, S = input_ids.shape
        smem_in, x, mask = self._prep(input_ids, attention_mask, seed)
        weights = self._stacked + (self.params["lin_w"],)
        kern = functools.partial(fused_decode_kernel,
                                 num_layers=self.num_layers,
                                 train=self.train, dropout_p=self.dropout)
        return pl.pallas_call(
            kern,
            out_shape=jax.ShapeDtypeStruct((B, S), jnp.int32),
            in_specs=[self._smem_spec] * 5
                     + [self._vmem_spec] * (2 + len(weights)),
            out_specs=self._vmem_spec,
            compiler_params=self._cparams,
        )(*smem_in, x, mask, *weights)

    def _loss_impl(self, input_ids, attention_mask, labels, seed):
        B, S = input_ids.shape
        smem_in, x, mask = self._prep(input_ids, attention_mask, seed)
        weights = self._stacked + (self.params["lin_w"],)
        kern = functools.partial(fused_loss_kernel,
                                 num_layers=self.num_layers,
                                 train=self.train, dropout_p=self.dropout)
        return pl.pallas_call(
            kern,
            out_shape=jax.ShapeDtypeStruct((1, 1), jnp.float32),
            in_specs=[self._smem_spec] * 5
                     + [self._vmem_spec] * (3 + len(weights)),
            out_specs=self._vmem_spec,
            compiler_params=self._cparams,
        )(*smem_in, x, mask, labels.astype(jnp.int32), *weights)

    def forward(self, input_ids, attention_mask, labels=None, seed=0):
        # Returns device arrays (no forced D2H sync); caller may np.asarray.
        if labels is None:
            return self._decode_jit(input_ids, attention_mask, seed)
        return self._loss_jit(input_ids, attention_mask, labels, seed)


# --------------------------------------------------------------------------
if __name__ == "__main__":
    B, S, H, F, V, L = 2, 8, 32, 64, 64, NUM_LABELS
    pkey, ikey, lkey = jax.random.split(jax.random.PRNGKey(0), 3)

    params = init_params(pkey, vocab=V, hidden=H, ffn=F, num_layers=2,
                         max_seq=S, num_labels=L)
    input_ids = jax.random.randint(ikey, (B, S), 0, V, dtype=jnp.int32)
    lengths = jnp.array([S, 5], dtype=jnp.int32)
    attention_mask = (jnp.arange(S)[None, :] < lengths[:, None]).astype(jnp.int32)
    labels = jax.random.randint(lkey, (B, S), 0, L, dtype=jnp.int32)

    model = AutoModelCRFPallas(params, dropout=0.1, train=False)

    tags = model.forward(input_ids, attention_mask, labels=None)      # decode
    loss = model.forward(input_ids, attention_mask, labels=labels)    # loss
    tags, loss = jax.block_until_ready((tags, loss))

    assert tags.shape == (B, S)
    assert tags.dtype == jnp.int32
    assert loss.shape == (1, 1)
    assert bool(jnp.isfinite(loss).all())
    print("KERNEL_OK")
</pallas_src>

<mosaic_0001>
module attributes {stable_mosaic.version = 11 : i64} {
  func.func @fused_decode_kernel(%arg0: memref<1xi32, #tpu.memory_space<smem>>, %arg1: memref<2xf32, #tpu.memory_space<smem>>, %arg2: memref<2xf32, #tpu.memory_space<smem>>, %arg3: memref<2xf32, #tpu.memory_space<smem>>, %arg4: memref<4xf32, #tpu.memory_space<smem>>, %arg5: memref<2x8x32xf32, #tpu.memory_space<vmem>>, %arg6: memref<2x8xi32, #tpu.memory_space<vmem>>, %arg7: memref<2x32x96xbf16, #tpu.memory_space<vmem>>, %arg8: memref<2x1x96xf32, #tpu.memory_space<vmem>>, %arg9: memref<2x32x32xbf16, #tpu.memory_space<vmem>>, %arg10: memref<2x1x32xf32, #tpu.memory_space<vmem>>, %arg11: memref<2x1x32xf32, #tpu.memory_space<vmem>>, %arg12: memref<2x1x32xf32, #tpu.memory_space<vmem>>, %arg13: memref<2x32x64xbf16, #tpu.memory_space<vmem>>, %arg14: memref<2x1x64xf32, #tpu.memory_space<vmem>>, %arg15: memref<2x64x32xbf16, #tpu.memory_space<vmem>>, %arg16: memref<2x1x32xf32, #tpu.memory_space<vmem>>, %arg17: memref<2x1x32xf32, #tpu.memory_space<vmem>>, %arg18: memref<2x1x32xf32, #tpu.memory_space<vmem>>, %arg19: memref<2x32xf32, #tpu.memory_space<vmem>>, %arg20: memref<2x8xi32, #tpu.memory_space<vmem>>) attributes {dimension_semantics = [], scalar_prefetch = 0 : i64, scratch_operands = 0 : i64, tpu.core_type = #tpu.core_type<tc>} {
    %c0 = arith.constant 0 : index
    %c0_0 = arith.constant 0 : index
    %c0_1 = arith.constant 0 : index
    %0 = vector.load %arg5[%c0, %c0_0, %c0_1] : memref<2x8x32xf32, #tpu.memory_space<vmem>>, vector<2x8x32xf32>
    %c0_2 = arith.constant 0 : index
    %c0_3 = arith.constant 0 : index
    %1 = vector.load %arg6[%c0_2, %c0_3] : memref<2x8xi32, #tpu.memory_space<vmem>>, vector<2x8xi32>
    %2 = arith.sitofp %1 : vector<2x8xi32> to vector<2x8xf32>
    %cst = arith.constant 1.000000e+00 : f32
    %3 = vector.broadcast %cst : f32 to vector<2x8xf32>
    %4 = arith.subf %3, %2 : vector<2x8xf32>
    %cst_4 = arith.constant -1.000000e+09 : f32
    %5 = vector.broadcast %cst_4 : f32 to vector<2x8xf32>
    %6 = arith.mulf %4, %5 : vector<2x8xf32>
    %7 = vector.shape_cast %6 : vector<2x8xf32> to vector<2x1x8xf32>
    %8 = vector.shape_cast %7 : vector<2x1x8xf32> to vector<2x1x8xf32>
    %9 = vector.broadcast %8 : vector<2x1x8xf32> to vector<2x8x8xf32>
    %10 = vector.shape_cast %0 : vector<2x8x32xf32> to vector<16x32xf32>
    %11 = arith.truncf %10 : vector<16x32xf32> to vector<16x32xbf16>
    %c0_5 = arith.constant 0 : index
    %c0_6 = arith.constant 0 : index
    %c0_7 = arith.constant 0 : index
    %12 = vector.load %arg7[%c0_5, %c0_6, %c0_7] : memref<2x32x96xbf16, #tpu.memory_space<vmem>>, vector<1x32x96xbf16>
    %13 = vector.shape_cast %12 : vector<1x32x96xbf16> to vector<32x96xbf16>
    %cst_8 = arith.constant dense<0.000000e+00> : vector<16x96xf32>
    %14 = tpu.matmul %11, %13, %cst_8 {dimension_numbers = #tpu.dot_dimension_numbers<[1], [0], [0], [1], [0, 0, 1, 1], [], []>} : vector<16x32xbf16>, vector<32x96xbf16>, vector<16x96xf32> -> vector<16x96xf32>
    %c0_9 = arith.constant 0 : index
    %c0_10 = arith.constant 0 : index
    %c0_11 = arith.constant 0 : index
    %15 = vector.load %arg8[%c0_9, %c0_10, %c0_11] : memref<2x1x96xf32, #tpu.memory_space<vmem>>, vector<1x1x96xf32>
    %16 = vector.shape_cast %15 : vector<1x1x96xf32> to vector<1x96xf32>
    %17 = vector.broadcast %16 : vector<1x96xf32> to vector<16x96xf32>
    %18 = arith.addf %14, %17 : vector<16x96xf32>
    %19 = vector.extract_strided_slice %18 {offsets = [0, 0], sizes = [16, 32], strides = [1, 1]} : vector<16x96xf32> to vector<16x32xf32>
    %20 = vector.shape_cast %19 : vector<16x32xf32> to vector<2x8x32xf32>
    %21 = arith.truncf %20 : vector<2x8x32xf32> to vector<2x8x32xbf16>
    %22 = vector.extract_strided_slice %18 {offsets = [0, 32], sizes = [16, 32], strides = [1, 1]} : vector<16x96xf32> to vector<16x32xf32>
    %23 = vector.shape_cast %22 : vector<16x32xf32> to vector<2x8x32xf32>
    %24 = arith.truncf %23 : vector<2x8x32xf32> to vector<2x8x32xbf16>
    %25 = vector.extract_strided_slice %18 {offsets = [0, 64], sizes = [16, 32], strides = [1, 1]} : vector<16x96xf32> to vector<16x32xf32>
    %26 = vector.shape_cast %25 : vector<16x32xf32> to vector<2x8x32xf32>
    %27 = arith.truncf %26 : vector<2x8x32xf32> to vector<2x8x32xbf16>
    "tpu.trace_start"() <{level = 10 : i32, message = "bqd,bkd->bqk"}> : () -> ()
    %cst_12 = arith.constant dense<0.000000e+00> : vector<2x8x8xf32>
    %28 = tpu.matmul %21, %24, %cst_12 {dimension_numbers = #tpu.dot_dimension_numbers<[2], [2], [1], [1], [0, 0, 0, 1, 1, 1], [0], [0]>} : vector<2x8x32xbf16>, vector<2x8x32xbf16>, vector<2x8x8xf32> -> vector<2x8x8xf32>
    "tpu.trace_stop"() : () -> ()
    %cst_13 = arith.constant 0.176776692 : f32
    %29 = vector.broadcast %cst_13 : f32 to vector<2x8x8xf32>
    %30 = arith.mulf %28, %29 : vector<2x8x8xf32>
    %31 = arith.addf %30, %9 : vector<2x8x8xf32>
    %cst_14 = arith.constant dense<0xFF800000> : vector<2x8xf32>
    %32 = vector.multi_reduction <maximumf>, %31, %cst_14 [2] : vector<2x8x8xf32> to vector<2x8xf32>
    %33 = vector.shape_cast %32 : vector<2x8xf32> to vector<2x8x1xf32>
    %34 = vector.broadcast %33 : vector<2x8x1xf32> to vector<2x8x8xf32>
    %35 = arith.subf %31, %34 : vector<2x8x8xf32>
    %36 = math.exp %35 : vector<2x8x8xf32>
    %cst_15 = arith.constant dense<0.000000e+00> : vector<2x8xf32>
    %37 = vector.multi_reduction <add>, %36, %cst_15 [2] : vector<2x8x8xf32> to vector<2x8xf32>
    %38 = vector.shape_cast %37 : vector<2x8xf32> to vector<2x8x1xf32>
    %39 = vector.broadcast %38 : vector<2x8x1xf32> to vector<2x8x8xf32>
    %40 = arith.divf %36, %39 : vector<2x8x8xf32>
    %41 = arith.truncf %40 : vector<2x8x8xf32> to vector<2x8x8xbf16>
    "tpu.trace_start"() <{level = 10 : i32, message = "bqk,bkd->bqd"}> : () -> ()
    %cst_16 = arith.constant dense<0.000000e+00> : vector<2x8x32xf32>
    %42 = tpu.matmul %41, %27, %cst_16 {dimension_numbers = #tpu.dot_dimension_numbers<[2], [1], [1], [2], [0, 0, 0, 1, 1, 2], [0], [0]>} : vector<2x8x8xbf16>, vector<2x8x32xbf16>, vector<2x8x32xf32> -> vector<2x8x32xf32>
    "tpu.trace_stop"() : () -> ()
    %43 = vector.shape_cast %42 : vector<2x8x32xf32> to vector<16x32xf32>
    %44 = arith.truncf %43 : vector<16x32xf32> to vector<16x32xbf16>
    %c0_17 = arith.constant 0 : index
    %c0_18 = arith.constant 0 : index
    %c0_19 = arith.constant 0 : index
    %45 = vector.load %arg9[%c0_17, %c0_18, %c0_19] : memref<2x32x32xbf16, #tpu.memory_space<vmem>>, vector<1x32x32xbf16>
    %46 = vector.shape_cast %45 : vector<1x32x32xbf16> to vector<32x32xbf16>
    %cst_20 = arith.constant dense<0.000000e+00> : vector<16x32xf32>
    %47 = tpu.matmul %44, %46, %cst_20 {dimension_numbers = #tpu.dot_dimension_numbers<[1], [0], [0], [1], [0, 0, 1, 1], [], []>} : vector<16x32xbf16>, vector<32x32xbf16>, vector<16x32xf32> -> vector<16x32xf32>
    %c0_21 = arith.constant 0 : index
    %c0_22 = arith.constant 0 : index
    %c0_23 = arith.constant 0 : index
    %48 = vector.load %arg10[%c0_21, %c0_22, %c0_23] : memref<2x1x32xf32, #tpu.memory_space<vmem>>, vector<1x1x32xf32>
    %49 = vector.shape_cast %48 : vector<1x1x32xf32> to vector<1x32xf32>
    %50 = vector.broadcast %49 : vector<1x32xf32> to vector<16x32xf32>
    %51 = arith.addf %47, %50 : vector<16x32xf32>
    %52 = arith.addf %10, %51 : vector<16x32xf32>
    %c0_24 = arith.constant 0 : index
    %c0_25 = arith.constant 0 : index
    %c0_26 = arith.constant 0 : index
    %53 = vector.load %arg11[%c0_24, %c0_25, %c0_26] : memref<2x1x32xf32, #tpu.memory_space<vmem>>, vector<1x1x32xf32>
    %54 = vector.shape_cast %53 : vector<1x1x32xf32> to vector<1x32xf32>
    %c0_27 = arith.constant 0 : index
    %c0_28 = arith.constant 0 : index
    %c0_29 = arith.constant 0 : index
    %55 = vector.load %arg12[%c0_27, %c0_28, %c0_29] : memref<2x1x32xf32, #tpu.memory_space<vmem>>, vector<1x1x32xf32>
    %56 = vector.shape_cast %55 : vector<1x1x32xf32> to vector<1x32xf32>
    %cst_30 = arith.constant dense<0.000000e+00> : vector<16xf32>
    %57 = vector.multi_reduction <add>, %52, %cst_30 [1] : vector<16x32xf32> to vector<16xf32>
    %58 = vector.shape_cast %57 : vector<16xf32> to vector<16x1xf32>
    %cst_31 = arith.constant 3.200000e+01 : f32
    %59 = vector.broadcast %cst_31 : f32 to vector<16x1xf32>
    %60 = arith.divf %58, %59 : vector<16x1xf32>
    %61 = vector.broadcast %60 : vector<16x1xf32> to vector<16x32xf32>
    %62 = arith.subf %52, %61 : vector<16x32xf32>
    %63 = arith.mulf %62, %62 : vector<16x32xf32>
    %cst_32 = arith.constant dense<0.000000e+00> : vector<16xf32>
    %64 = vector.multi_reduction <add>, %63, %cst_32 [1] : vector<16x32xf32> to vector<16xf32>
    %65 = vector.shape_cast %64 : vector<16xf32> to vector<16x1xf32>
    %cst_33 = arith.constant 3.200000e+01 : f32
    %66 = vector.broadcast %cst_33 : f32 to vector<16x1xf32>
    %67 = arith.divf %65, %66 : vector<16x1xf32>
    %68 = vector.broadcast %60 : vector<16x1xf32> to vector<16x32xf32>
    %69 = arith.subf %52, %68 : vector<16x32xf32>
    %cst_34 = arith.constant 9.99999974E-6 : f32
    %70 = vector.broadcast %cst_34 : f32 to vector<16x1xf32>
    %71 = arith.addf %67, %70 : vector<16x1xf32>
    %72 = math.rsqrt %71 : vector<16x1xf32>
    %73 = vector.broadcast %72 : vector<16x1xf32> to vector<16x32xf32>
    %74 = arith.mulf %69, %73 : vector<16x32xf32>
    %75 = vector.broadcast %54 : vector<1x32xf32> to vector<16x32xf32>
    %76 = arith.mulf %74, %75 : vector<16x32xf32>
    %77 = vector.broadcast %56 : vector<1x32xf32> to vector<16x32xf32>
    %78 = arith.addf %76, %77 : vector<16x32xf32>
    %79 = arith.truncf %78 : vector<16x32xf32> to vector<16x32xbf16>
    %c0_35 = arith.constant 0 : index
    %c0_36 = arith.constant 0 : index
    %c0_37 = arith.constant 0 : index
    %80 = vector.load %arg13[%c0_35, %c0_36, %c0_37] : memref<2x32x64xbf16, #tpu.memory_space<vmem>>, vector<1x32x64xbf16>
    %81 = vector.shape_cast %80 : vector<1x32x64xbf16> to vector<32x64xbf16>
    %cst_38 = arith.constant dense<0.000000e+00> : vector<16x64xf32>
    %82 = tpu.matmul %79, %81, %cst_38 {dimension_numbers = #tpu.dot_dimension_numbers<[1], [0], [0], [1], [0, 0, 1, 1], [], []>} : vector<16x32xbf16>, vector<32x64xbf16>, vector<16x64xf32> -> vector<16x64xf32>
    %c0_39 = arith.constant 0 : index
    %c0_40 = arith.constant 0 : index
    %c0_41 = arith.constant 0 : index
    %83 = vector.load %arg14[%c0_39, %c0_40, %c0_41] : memref<2x1x64xf32, #tpu.memory_space<vmem>>, vector<1x1x64xf32>
    %84 = vector.shape_cast %83 : vector<1x1x64xf32> to vector<1x64xf32>
    %85 = vector.broadcast %84 : vector<1x64xf32> to vector<16x64xf32>
    %86 = arith.addf %82, %85 : vector<16x64xf32>
    %87 = arith.mulf %86, %86 : vector<16x64xf32>
    %88 = arith.mulf %86, %87 : vector<16x64xf32>
    %cst_42 = arith.constant 4.471500e-02 : f32
    %89 = vector.broadcast %cst_42 : f32 to vector<16x64xf32>
    %90 = arith.mulf %89, %88 : vector<16x64xf32>
    %91 = arith.addf %86, %90 : vector<16x64xf32>
    %cst_43 = arith.constant 0.797884583 : f32
    %92 = vector.broadcast %cst_43 : f32 to vector<16x64xf32>
    %93 = arith.mulf %92, %91 : vector<16x64xf32>
    %94 = math.tanh %93 : vector<16x64xf32>
    %cst_44 = arith.constant 1.000000e+00 : f32
    %95 = vector.broadcast %cst_44 : f32 to vector<16x64xf32>
    %96 = arith.addf %95, %94 : vector<16x64xf32>
    %cst_45 = arith.constant 5.000000e-01 : f32
    %97 = vector.broadcast %cst_45 : f32 to vector<16x64xf32>
    %98 = arith.mulf %97, %96 : vector<16x64xf32>
    %99 = arith.mulf %86, %98 : vector<16x64xf32>
    %100 = arith.truncf %99 : vector<16x64xf32> to vector<16x64xbf16>
    %c0_46 = arith.constant 0 : index
    %c0_47 = arith.constant 0 : index
    %c0_48 = arith.constant 0 : index
    %101 = vector.load %arg15[%c0_46, %c0_47, %c0_48] : memref<2x64x32xbf16, #tpu.memory_space<vmem>>, vector<1x64x32xbf16>
    %102 = vector.shape_cast %101 : vector<1x64x32xbf16> to vector<64x32xbf16>
    %cst_49 = arith.constant dense<0.000000e+00> : vector<16x32xf32>
    %103 = tpu.matmul %100, %102, %cst_49 {dimension_numbers = #tpu.dot_dimension_numbers<[1], [0], [0], [1], [0, 0, 1, 1], [], []>} : vector<16x64xbf16>, vector<64x32xbf16>, vector<16x32xf32> -> vector<16x32xf32>
    %c0_50 = arith.constant 0 : index
    %c0_51 = arith.constant 0 : index
    %c0_52 = arith.constant 0 : index
    %104 = vector.load %arg16[%c0_50, %c0_51, %c0_52] : memref<2x1x32xf32, #tpu.memory_space<vmem>>, vector<1x1x32xf32>
    %105 = vector.shape_cast %104 : vector<1x1x32xf32> to vector<1x32xf32>
    %106 = vector.broadcast %105 : vector<1x32xf32> to vector<16x32xf32>
    %107 = arith.addf %103, %106 : vector<16x32xf32>
    %108 = arith.addf %78, %107 : vector<16x32xf32>
    %c0_53 = arith.constant 0 : index
    %c0_54 = arith.constant 0 : index
    %c0_55 = arith.constant 0 : index
    %109 = vector.load %arg17[%c0_53, %c0_54, %c0_55] : memref<2x1x32xf32, #tpu.memory_space<vmem>>, vector<1x1x32xf32>
    %110 = vector.shape_cast %109 : vector<1x1x32xf32> to vector<1x32xf32>
    %c0_56 = arith.constant 0 : index
    %c0_57 = arith.constant 0 : index
    %c0_58 = arith.constant 0 : index
    %111 = vector.load %arg18[%c0_56, %c0_57, %c0_58] : memref<2x1x32xf32, #tpu.memory_space<vmem>>, vector<1x1x32xf32>
    %112 = vector.shape_cast %111 : vector<1x1x32xf32> to vector<1x32xf32>
    %cst_59 = arith.constant dense<0.000000e+00> : vector<16xf32>
    %113 = vector.multi_reduction <add>, %108, %cst_59 [1] : vector<16x32xf32> to vector<16xf32>
    %114 = vector.shape_cast %113 : vector<16xf32> to vector<16x1xf32>
    %cst_60 = arith.constant 3.200000e+01 : f32
    %115 = vector.broadcast %cst_60 : f32 to vector<16x1xf32>
    %116 = arith.divf %114, %115 : vector<16x1xf32>
    %117 = vector.broadcast %116 : vector<16x1xf32> to vector<16x32xf32>
    %118 = arith.subf %108, %117 : vector<16x32xf32>
    %119 = arith.mulf %118, %118 : vector<16x32xf32>
    %cst_61 = arith.constant dense<0.000000e+00> : vector<16xf32>
    %120 = vector.multi_reduction <add>, %119, %cst_61 [1] : vector<16x32xf32> to vector<16xf32>
    %121 = vector.shape_cast %120 : vector<16xf32> to vector<16x1xf32>
    %cst_62 = arith.constant 3.200000e+01 : f32
    %122 = vector.broadcast %cst_62 : f32 to vector<16x1xf32>
    %123 = arith.divf %121, %122 : vector<16x1xf32>
    %124 = vector.broadcast %116 : vector<16x1xf32> to vector<16x32xf32>
    %125 = arith.subf %108, %124 : vector<16x32xf32>
    %cst_63 = arith.constant 9.99999974E-6 : f32
    %126 = vector.broadcast %cst_63 : f32 to vector<16x1xf32>
    %127 = arith.addf %123, %126 : vector<16x1xf32>
    %128 = math.rsqrt %127 : vector<16x1xf32>
    %129 = vector.broadcast %128 : vector<16x1xf32> to vector<16x32xf32>
    %130 = arith.mulf %125, %129 : vector<16x32xf32>
    %131 = vector.broadcast %110 : vector<1x32xf32> to vector<16x32xf32>
    %132 = arith.mulf %130, %131 : vector<16x32xf32>
    %133 = vector.broadcast %112 : vector<1x32xf32> to vector<16x32xf32>
    %134 = arith.addf %132, %133 : vector<16x32xf32>
    %135 = arith.truncf %134 : vector<16x32xf32> to vector<16x32xbf16>
    %c1 = arith.constant 1 : index
    %c0_64 = arith.constant 0 : index
    %c0_65 = arith.constant 0 : index
    %136 = vector.load %arg7[%c1, %c0_64, %c0_65] : memref<2x32x96xbf16, #tpu.memory_space<vmem>>, vector<1x32x96xbf16>
    %137 = vector.shape_cast %136 : vector<1x32x96xbf16> to vector<32x96xbf16>
    %cst_66 = arith.constant dense<0.000000e+00> : vector<16x96xf32>
    %138 = tpu.matmul %135, %137, %cst_66 {dimension_numbers = #tpu.dot_dimension_numbers<[1], [0], [0], [1], [0, 0, 1, 1], [], []>} : vector<16x32xbf16>, vector<32x96xbf16>, vector<16x96xf32> -> vector<16x96xf32>
    %c1_67 = arith.constant 1 : index
    %c0_68 = arith.constant 0 : index
    %c0_69 = arith.constant 0 : index
    %139 = vector.load %arg8[%c1_67, %c0_68, %c0_69] : memref<2x1x96xf32, #tpu.memory_space<vmem>>, vector<1x1x96xf32>
    %140 = vector.shape_cast %139 : vector<1x1x96xf32> to vector<1x96xf32>
    %141 = vector.broadcast %140 : vector<1x96xf32> to vector<16x96xf32>
    %142 = arith.addf %138, %141 : vector<16x96xf32>
    %143 = vector.extract_strided_slice %142 {offsets = [0, 0], sizes = [16, 32], strides = [1, 1]} : vector<16x96xf32> to vector<16x32xf32>
    %144 = vector.shape_cast %143 : vector<16x32xf32> to vector<2x8x32xf32>
    %145 = arith.truncf %144 : vector<2x8x32xf32> to vector<2x8x32xbf16>
    %146 = vector.extract_strided_slice %142 {offsets = [0, 32], sizes = [16, 32], strides = [1, 1]} : vector<16x96xf32> to vector<16x32xf32>
    %147 = vector.shape_cast %146 : vector<16x32xf32> to vector<2x8x32xf32>
    %148 = arith.truncf %147 : vector<2x8x32xf32> to vector<2x8x32xbf16>
    %149 = vector.extract_strided_slice %142 {offsets = [0, 64], sizes = [16, 32], strides = [1, 1]} : vector<16x96xf32> to vector<16x32xf32>
    %150 = vector.shape_cast %149 : vector<16x32xf32> to vector<2x8x32xf32>
    %151 = arith.truncf %150 : vector<2x8x32xf32> to vector<2x8x32xbf16>
    "tpu.trace_start"() <{level = 10 : i32, message = "bqd,bkd->bqk"}> : () -> ()
    %cst_70 = arith.constant dense<0.000000e+00> : vector<2x8x8xf32>
    %152 = tpu.matmul %145, %148, %cst_70 {dimension_numbers = #tpu.dot_dimension_numbers<[2], [2], [1], [1], [0, 0, 0, 1, 1, 1], [0], [0]>} : vector<2x8x32xbf16>, vector<2x8x32xbf16>, vector<2x8x8xf32> -> vector<2x8x8xf32>
    "tpu.trace_stop"() : () -> ()
    %cst_71 = arith.constant 0.176776692 : f32
    %153 = vector.broadcast %cst_71 : f32 to vector<2x8x8xf32>
    %154 = arith.mulf %152, %153 : vector<2x8x8xf32>
    %155 = arith.addf %154, %9 : vector<2x8x8xf32>
    %cst_72 = arith.constant dense<0xFF800000> : vector<2x8xf32>
    %156 = vector.multi_reduction <maximumf>, %155, %cst_72 [2] : vector<2x8x8xf32> to vector<2x8xf32>
    %157 = vector.shape_cast %156 : vector<2x8xf32> to vector<2x8x1xf32>
    %158 = vector.broadcast %157 : vector<2x8x1xf32> to vector<2x8x8xf32>
    %159 = arith.subf %155, %158 : vector<2x8x8xf32>
    %160 = math.exp %159 : vector<2x8x8xf32>
    %cst_73 = arith.constant dense<0.000000e+00> : vector<2x8xf32>
    %161 = vector.multi_reduction <add>, %160, %cst_73 [2] : vector<2x8x8xf32> to vector<2x8xf32>
    %162 = vector.shape_cast %161 : vector<2x8xf32> to vector<2x8x1xf32>
    %163 = vector.broadcast %162 : vector<2x8x1xf32> to vector<2x8x8xf32>
    %164 = arith.divf %160, %163 : vector<2x8x8xf32>
    %165 = arith.truncf %164 : vector<2x8x8xf32> to vector<2x8x8xbf16>
    "tpu.trace_start"() <{level = 10 : i32, message = "bqk,bkd->bqd"}> : () -> ()
    %cst_74 = arith.constant dense<0.000000e+00> : vector<2x8x32xf32>
    %166 = tpu.matmul %165, %151, %cst_74 {dimension_numbers = #tpu.dot_dimension_numbers<[2], [1], [1], [2], [0, 0, 0, 1, 1, 2], [0], [0]>} : vector<2x8x8xbf16>, vector<2x8x32xbf16>, vector<2x8x32xf32> -> vector<2x8x32xf32>
    "tpu.trace_stop"() : () -> ()
    %167 = vector.shape_cast %166 : vector<2x8x32xf32> to vector<16x32xf32>
    %168 = arith.truncf %167 : vector<16x32xf32> to vector<16x32xbf16>
    %c1_75 = arith.constant 1 : index
    %c0_76 = arith.constant 0 : index
    %c0_77 = arith.constant 0 : index
    %169 = vector.load %arg9[%c1_75, %c0_76, %c0_77] : memref<2x32x32xbf16, #tpu.memory_space<vmem>>, vector<1x32x32xbf16>
    %170 = vector.shape_cast %169 : vector<1x32x32xbf16> to vector<32x32xbf16>
    %cst_78 = arith.constant dense<0.000000e+00> : vector<16x32xf32>
    %171 = tpu.matmul %168, %170, %cst_78 {dimension_numbers = #tpu.dot_dimension_numbers<[1], [0], [0], [1], [0, 0, 1, 1], [], []>} : vector<16x32xbf16>, vector<32x32xbf16>, vector<16x32xf32> -> vector<16x32xf32>
    %c1_79 = arith.constant 1 : index
    %c0_80 = arith.constant 0 : index
    %c0_81 = arith.constant 0 : index
    %172 = vector.load %arg10[%c1_79, %c0_80, %c0_81] : memref<2x1x32xf32, #tpu.memory_space<vmem>>, vector<1x1x32xf32>
    %173 = vector.shape_cast %172 : vector<1x1x32xf32> to vector<1x32xf32>
    %174 = vector.broadcast %173 : vector<1x32xf32> to vector<16x32xf32>
    %175 = arith.addf %171, %174 : vector<16x32xf32>
    %176 = arith.addf %134, %175 : vector<16x32xf32>
    %c1_82 = arith.constant 1 : index
    %c0_83 = arith.constant 0 : index
    %c0_84 = arith.constant 0 : index
    %177 = vector.load %arg11[%c1_82, %c0_83, %c0_84] : memref<2x1x32xf32, #tpu.memory_space<vmem>>, vector<1x1x32xf32>
    %178 = vector.shape_cast %177 : vector<1x1x32xf32> to vector<1x32xf32>
    %c1_85 = arith.constant 1 : index
    %c0_86 = arith.constant 0 : index
    %c0_87 = arith.constant 0 : index
    %179 = vector.load %arg12[%c1_85, %c0_86, %c0_87] : memref<2x1x32xf32, #tpu.memory_space<vmem>>, vector<1x1x32xf32>
    %180 = vector.shape_cast %179 : vector<1x1x32xf32> to vector<1x32xf32>
    %cst_88 = arith.constant dense<0.000000e+00> : vector<16xf32>
    %181 = vector.multi_reduction <add>, %176, %cst_88 [1] : vector<16x32xf32> to vector<16xf32>
    %182 = vector.shape_cast %181 : vector<16xf32> to vector<16x1xf32>
    %cst_89 = arith.constant 3.200000e+01 : f32
    %183 = vector.broadcast %cst_89 : f32 to vector<16x1xf32>
    %184 = arith.divf %182, %183 : vector<16x1xf32>
    %185 = vector.broadcast %184 : vector<16x1xf32> to vector<16x32xf32>
    %186 = arith.subf %176, %185 : vector<16x32xf32>
    %187 = arith.mulf %186, %186 : vector<16x32xf32>
    %cst_90 = arith.constant dense<0.000000e+00> : vector<16xf32>
    %188 = vector.multi_reduction <add>, %187, %cst_90 [1] : vector<16x32xf32> to vector<16xf32>
    %189 = vector.shape_cast %188 : vector<16xf32> to vector<16x1xf32>
    %cst_91 = arith.constant 3.200000e+01 : f32
    %190 = vector.broadcast %cst_91 : f32 to vector<16x1xf32>
    %191 = arith.divf %189, %190 : vector<16x1xf32>
    %192 = vector.broadcast %184 : vector<16x1xf32> to vector<16x32xf32>
    %193 = arith.subf %176, %192 : vector<16x32xf32>
    %cst_92 = arith.constant 9.99999974E-6 : f32
    %194 = vector.broadcast %cst_92 : f32 to vector<16x1xf32>
    %195 = arith.addf %191, %194 : vector<16x1xf32>
    %196 = math.rsqrt %195 : vector<16x1xf32>
    %197 = vector.broadcast %196 : vector<16x1xf32> to vector<16x32xf32>
    %198 = arith.mulf %193, %197 : vector<16x32xf32>
    %199 = vector.broadcast %178 : vector<1x32xf32> to vector<16x32xf32>
    %200 = arith.mulf %198, %199 : vector<16x32xf32>
    %201 = vector.broadcast %180 : vector<1x32xf32> to vector<16x32xf32>
    %202 = arith.addf %200, %201 : vector<16x32xf32>
    %203 = arith.truncf %202 : vector<16x32xf32> to vector<16x32xbf16>
    %c1_93 = arith.constant 1 : index
    %c0_94 = arith.constant 0 : index
    %c0_95 = arith.constant 0 : index
    %204 = vector.load %arg13[%c1_93, %c0_94, %c0_95] : memref<2x32x64xbf16, #tpu.memory_space<vmem>>, vector<1x32x64xbf16>
    %205 = vector.shape_cast %204 : vector<1x32x64xbf16> to vector<32x64xbf16>
    %cst_96 = arith.constant dense<0.000000e+00> : vector<16x64xf32>
    %206 = tpu.matmul %203, %205, %cst_96 {dimension_numbers = #tpu.dot_dimension_numbers<[1], [0], [0], [1], [0, 0, 1, 1], [], []>} : vector<16x32xbf16>, vector<32x64xbf16>, vector<16x64xf32> -> vector<16x64xf32>
    %c1_97 = arith.constant 1 : index
    %c0_98 = arith.constant 0 : index
    %c0_99 = arith.constant 0 : index
    %207 = vector.load %arg14[%c1_97, %c0_98, %c0_99] : memref<2x1x64xf32, #tpu.memory_space<vmem>>, vector<1x1x64xf32>
    %208 = vector.shape_cast %207 : vector<1x1x64xf32> to vector<1x64xf32>
    %209 = vector.broadcast %208 : vector<1x64xf32> to vector<16x64xf32>
    %210 = arith.addf %206, %209 : vector<16x64xf32>
    %211 = arith.mulf %210, %210 : vector<16x64xf32>
    %212 = arith.mulf %210, %211 : vector<16x64xf32>
    %cst_100 = arith.constant 4.471500e-02 : f32
    %213 = vector.broadcast %cst_100 : f32 to vector<16x64xf32>
    %214 = arith.mulf %213, %212 : vector<16x64xf32>
    %215 = arith.addf %210, %214 : vector<16x64xf32>
    %cst_101 = arith.constant 0.797884583 : f32
    %216 = vector.broadcast %cst_101 : f32 to vector<16x64xf32>
    %217 = arith.mulf %216, %215 : vector<16x64xf32>
    %218 = math.tanh %217 : vector<16x64xf32>
    %cst_102 = arith.constant 1.000000e+00 : f32
    %219 = vector.broadcast %cst_102 : f32 to vector<16x64xf32>
    %220 = arith.addf %219, %218 : vector<16x64xf32>
    %cst_103 = arith.constant 5.000000e-01 : f32
    %221 = vector.broadcast %cst_103 : f32 to vector<16x64xf32>
    %222 = arith.mulf %221, %220 : vector<16x64xf32>
    %223 = arith.mulf %210, %222 : vector<16x64xf32>
    %224 = arith.truncf %223 : vector<16x64xf32> to vector<16x64xbf16>
    %c1_104 = arith.constant 1 : index
    %c0_105 = arith.constant 0 : index
    %c0_106 = arith.constant 0 : index
    %225 = vector.load %arg15[%c1_104, %c0_105, %c0_106] : memref<2x64x32xbf16, #tpu.memory_space<vmem>>, vector<1x64x32xbf16>
    %226 = vector.shape_cast %225 : vector<1x64x32xbf16> to vector<64x32xbf16>
    %cst_107 = arith.constant dense<0.000000e+00> : vector<16x32xf32>
    %227 = tpu.matmul %224, %226, %cst_107 {dimension_numbers = #tpu.dot_dimension_numbers<[1], [0], [0], [1], [0, 0, 1, 1], [], []>} : vector<16x64xbf16>, vector<64x32xbf16>, vector<16x32xf32> -> vector<16x32xf32>
    %c1_108 = arith.constant 1 : index
    %c0_109 = arith.constant 0 : index
    %c0_110 = arith.constant 0 : index
    %228 = vector.load %arg16[%c1_108, %c0_109, %c0_110] : memref<2x1x32xf32, #tpu.memory_space<vmem>>, vector<1x1x32xf32>
    %229 = vector.shape_cast %228 : vector<1x1x32xf32> to vector<1x32xf32>
    %230 = vector.broadcast %229 : vector<1x32xf32> to vector<16x32xf32>
    %231 = arith.addf %227, %230 : vector<16x32xf32>
    %232 = arith.addf %202, %231 : vector<16x32xf32>
    %c1_111 = arith.constant 1 : index
    %c0_112 = arith.constant 0 : index
    %c0_113 = arith.constant 0 : index
    %233 = vector.load %arg17[%c1_111, %c0_112, %c0_113] : memref<2x1x32xf32, #tpu.memory_space<vmem>>, vector<1x1x32xf32>
    %234 = vector.shape_cast %233 : vector<1x1x32xf32> to vector<1x32xf32>
    %c1_114 = arith.constant 1 : index
    %c0_115 = arith.constant 0 : index
    %c0_116 = arith.constant 0 : index
    %235 = vector.load %arg18[%c1_114, %c0_115, %c0_116] : memref<2x1x32xf32, #tpu.memory_space<vmem>>, vector<1x1x32xf32>
    %236 = vector.shape_cast %235 : vector<1x1x32xf32> to vector<1x32xf32>
    %cst_117 = arith.constant dense<0.000000e+00> : vector<16xf32>
    %237 = vector.multi_reduction <add>, %232, %cst_117 [1] : vector<16x32xf32> to vector<16xf32>
    %238 = vector.shape_cast %237 : vector<16xf32> to vector<16x1xf32>
    %cst_118 = arith.constant 3.200000e+01 : f32
    %239 = vector.broadcast %cst_118 : f32 to vector<16x1xf32>
    %240 = arith.divf %238, %239 : vector<16x1xf32>
    %241 = vector.broadcast %240 : vector<16x1xf32> to vector<16x32xf32>
    %242 = arith.subf %232, %241 : vector<16x32xf32>
    %243 = arith.mulf %242, %242 : vector<16x32xf32>
    %cst_119 = arith.constant dense<0.000000e+00> : vector<16xf32>
    %244 = vector.multi_reduction <add>, %243, %cst_119 [1] : vector<16x32xf32> to vector<16xf32>
    %245 = vector.shape_cast %244 : vector<16xf32> to vector<16x1xf32>
    %cst_120 = arith.constant 3.200000e+01 : f32
    %246 = vector.broadcast %cst_120 : f32 to vector<16x1xf32>
    %247 = arith.divf %245, %246 : vector<16x1xf32>
    %248 = vector.broadcast %240 : vector<16x1xf32> to vector<16x32xf32>
    %249 = arith.subf %232, %248 : vector<16x32xf32>
    %cst_121 = arith.constant 9.99999974E-6 : f32
    %250 = vector.broadcast %cst_121 : f32 to vector<16x1xf32>
    %251 = arith.addf %247, %250 : vector<16x1xf32>
    %252 = math.rsqrt %251 : vector<16x1xf32>
    %253 = vector.broadcast %252 : vector<16x1xf32> to vector<16x32xf32>
    %254 = arith.mulf %249, %253 : vector<16x32xf32>
    %255 = vector.broadcast %234 : vector<1x32xf32> to vector<16x32xf32>
    %256 = arith.mulf %254, %255 : vector<16x32xf32>
    %257 = vector.broadcast %236 : vector<1x32xf32> to vector<16x32xf32>
    %258 = arith.addf %256, %257 : vector<16x32xf32>
    %259 = vector.shape_cast %258 : vector<16x32xf32> to vector<2x8x32xf32>
    %c0_122 = arith.constant 0 : index
    %c0_123 = arith.constant 0 : index
    %260 = vector.load %arg19[%c0_122, %c0_123] : memref<2x32xf32, #tpu.memory_space<vmem>>, vector<1x32xf32>
    %c1_124 = arith.constant 1 : index
    %c0_125 = arith.constant 0 : index
    %261 = vector.load %arg19[%c1_124, %c0_125] : memref<2x32xf32, #tpu.memory_space<vmem>>, vector<1x32xf32>
    %262 = vector.shape_cast %260 : vector<1x32xf32> to vector<1x1x32xf32>
    %263 = vector.broadcast %262 : vector<1x1x32xf32> to vector<2x8x32xf32>
    %264 = arith.mulf %259, %263 : vector<2x8x32xf32>
    %cst_126 = arith.constant dense<0.000000e+00> : vector<2x8xf32>
    %265 = vector.multi_reduction <add>, %264, %cst_126 [2] : vector<2x8x32xf32> to vector<2x8xf32>
    %c0_127 = arith.constant 0 : index
    %266 = memref.load %arg1[%c0_127] : memref<2xf32, #tpu.memory_space<smem>>
    %267 = vector.broadcast %266 : f32 to vector<2x8xf32>
    %268 = arith.addf %265, %267 : vector<2x8xf32>
    %269 = vector.shape_cast %261 : vector<1x32xf32> to vector<1x1x32xf32>
    %270 = vector.broadcast %269 : vector<1x1x32xf32> to vector<2x8x32xf32>
    %271 = arith.mulf %259, %270 : vector<2x8x32xf32>
    %cst_128 = arith.constant dense<0.000000e+00> : vector<2x8xf32>
    %272 = vector.multi_reduction <add>, %271, %cst_128 [2] : vector<2x8x32xf32> to vector<2x8xf32>
    %c1_129 = arith.constant 1 : index
    %273 = memref.load %arg1[%c1_129] : memref<2xf32, #tpu.memory_space<smem>>
    %274 = vector.broadcast %273 : f32 to vector<2x8xf32>
    %275 = arith.addf %272, %274 : vector<2x8xf32>
    %c0_130 = arith.constant 0 : index
    %276 = memref.load %arg2[%c0_130] : memref<2xf32, #tpu.memory_space<smem>>
    %c1_131 = arith.constant 1 : index
    %277 = memref.load %arg2[%c1_131] : memref<2xf32, #tpu.memory_space<smem>>
    %c0_132 = arith.constant 0 : index
    %278 = memref.load %arg3[%c0_132] : memref<2xf32, #tpu.memory_space<smem>>
    %c1_133 = arith.constant 1 : index
    %279 = memref.load %arg3[%c1_133] : memref<2xf32, #tpu.memory_space<smem>>
    %c0_134 = arith.constant 0 : index
    %280 = memref.load %arg4[%c0_134] : memref<4xf32, #tpu.memory_space<smem>>
    %c1_135 = arith.constant 1 : index
    %281 = memref.load %arg4[%c1_135] : memref<4xf32, #tpu.memory_space<smem>>
    %c2 = arith.constant 2 : index
    %282 = memref.load %arg4[%c2] : memref<4xf32, #tpu.memory_space<smem>>
    %c3 = arith.constant 3 : index
    %283 = memref.load %arg4[%c3] : memref<4xf32, #tpu.memory_space<smem>>
    %cst_136 = arith.constant dense<0> : vector<2xi32>
    %284 = vector.multi_reduction <add>, %1, %cst_136 [1] : vector<2x8xi32> to vector<2xi32>
    %285 = vector.shape_cast %284 : vector<2xi32> to vector<2x1xi32>
    %c1_i32 = arith.constant 1 : i32
    %286 = vector.broadcast %c1_i32 : i32 to vector<2x1xi32>
    %287 = arith.subi %285, %286 : vector<2x1xi32>
    %c0_i32 = arith.constant 0 : i32
    %288 = vector.broadcast %c0_i32 : i32 to vector<2x1xi32>
    %289 = arith.maxsi %287, %288 : vector<2x1xi32>
    %290 = vector.extract_strided_slice %268 {offsets = [0, 0], sizes = [2, 1], strides = [1, 1]} : vector<2x8xf32> to vector<2x1xf32>
    %291 = vector.broadcast %276 : f32 to vector<2x1xf32>
    %292 = arith.addf %291, %290 : vector<2x1xf32>
    %293 = vector.extract_strided_slice %275 {offsets = [0, 0], sizes = [2, 1], strides = [1, 1]} : vector<2x8xf32> to vector<2x1xf32>
    %294 = vector.broadcast %277 : f32 to vector<2x1xf32>
    %295 = arith.addf %294, %293 : vector<2x1xf32>
    %296 = vector.extract_strided_slice %268 {offsets = [0, 1], sizes = [2, 1], strides = [1, 1]} : vector<2x8xf32> to vector<2x1xf32>
    %297 = vector.extract_strided_slice %275 {offsets = [0, 1], sizes = [2, 1], strides = [1, 1]} : vector<2x8xf32> to vector<2x1xf32>
    %298 = vector.extract_strided_slice %2 {offsets = [0, 1], sizes = [2, 1], strides = [1, 1]} : vector<2x8xf32> to vector<2x1xf32>
    %cst_137 = arith.constant 5.000000e-01 : f32
    %299 = vector.broadcast %cst_137 : f32 to vector<2x1xf32>
    %300 = arith.cmpf ogt, %298, %299 : vector<2x1xf32>
    %301 = vector.broadcast %280 : f32 to vector<2x1xf32>
    %302 = arith.addf %292, %301 : vector<2x1xf32>
    %303 = vector.broadcast %282 : f32 to vector<2x1xf32>
    %304 = arith.addf %295, %303 : vector<2x1xf32>
    %305 = vector.broadcast %281 : f32 to vector<2x1xf32>
    %306 = arith.addf %292, %305 : vector<2x1xf32>
    %307 = vector.broadcast %283 : f32 to vector<2x1xf32>
    %308 = arith.addf %295, %307 : vector<2x1xf32>
    %309 = arith.maximumf %302, %304 : vector<2x1xf32>
    %310 = arith.addf %309, %296 : vector<2x1xf32>
    %311 = arith.maximumf %306, %308 : vector<2x1xf32>
    %312 = arith.addf %311, %297 : vector<2x1xf32>
    %313 = arith.cmpf ogt, %304, %302 : vector<2x1xf32>
    %314 = arith.extui %313 : vector<2x1xi1> to vector<2x1xi32>
    %315 = arith.cmpf ogt, %308, %306 : vector<2x1xf32>
    %316 = arith.extui %315 : vector<2x1xi1> to vector<2x1xi32>
    %317 = arith.select %300, %310, %292 : vector<2x1xi1>, vector<2x1xf32>
    %318 = arith.select %300, %312, %295 : vector<2x1xi1>, vector<2x1xf32>
    %319 = vector.extract_strided_slice %268 {offsets = [0, 2], sizes = [2, 1], strides = [1, 1]} : vector<2x8xf32> to vector<2x1xf32>
    %320 = vector.extract_strided_slice %275 {offsets = [0, 2], sizes = [2, 1], strides = [1, 1]} : vector<2x8xf32> to vector<2x1xf32>
    %321 = vector.extract_strided_slice %2 {offsets = [0, 2], sizes = [2, 1], strides = [1, 1]} : vector<2x8xf32> to vector<2x1xf32>
    %cst_138 = arith.constant 5.000000e-01 : f32
    %322 = vector.broadcast %cst_138 : f32 to vector<2x1xf32>
    %323 = arith.cmpf ogt, %321, %322 : vector<2x1xf32>
    %324 = vector.broadcast %280 : f32 to vector<2x1xf32>
    %325 = arith.addf %317, %324 : vector<2x1xf32>
    %326 = vector.broadcast %282 : f32 to vector<2x1xf32>
    %327 = arith.addf %318, %326 : vector<2x1xf32>
    %328 = vector.broadcast %281 : f32 to vector<2x1xf32>
    %329 = arith.addf %317, %328 : vector<2x1xf32>
    %330 = vector.broadcast %283 : f32 to vector<2x1xf32>
    %331 = arith.addf %318, %330 : vector<2x1xf32>
    %332 = arith.maximumf %325, %327 : vector<2x1xf32>
    %333 = arith.addf %332, %319 : vector<2x1xf32>
    %334 = arith.maximumf %329, %331 : vector<2x1xf32>
    %335 = arith.addf %334, %320 : vector<2x1xf32>
    %336 = arith.cmpf ogt, %327, %325 : vector<2x1xf32>
    %337 = arith.extui %336 : vector<2x1xi1> to vector<2x1xi32>
    %338 = arith.cmpf ogt, %331, %329 : vector<2x1xf32>
    %339 = arith.extui %338 : vector<2x1xi1> to vector<2x1xi32>
    %340 = arith.select %323, %333, %317 : vector<2x1xi1>, vector<2x1xf32>
    %341 = arith.select %323, %335, %318 : vector<2x1xi1>, vector<2x1xf32>
    %342 = vector.extract_strided_slice %268 {offsets = [0, 3], sizes = [2, 1], strides = [1, 1]} : vector<2x8xf32> to vector<2x1xf32>
    %343 = vector.extract_strided_slice %275 {offsets = [0, 3], sizes = [2, 1], strides = [1, 1]} : vector<2x8xf32> to vector<2x1xf32>
    %344 = vector.extract_strided_slice %2 {offsets = [0, 3], sizes = [2, 1], strides = [1, 1]} : vector<2x8xf32> to vector<2x1xf32>
    %cst_139 = arith.constant 5.000000e-01 : f32
    %345 = vector.broadcast %cst_139 : f32 to vector<2x1xf32>
    %346 = arith.cmpf ogt, %344, %345 : vector<2x1xf32>
    %347 = vector.broadcast %280 : f32 to vector<2x1xf32>
    %348 = arith.addf %340, %347 : vector<2x1xf32>
    %349 = vector.broadcast %282 : f32 to vector<2x1xf32>
    %350 = arith.addf %341, %349 : vector<2x1xf32>
    %351 = vector.broadcast %281 : f32 to vector<2x1xf32>
    %352 = arith.addf %340, %351 : vector<2x1xf32>
    %353 = vector.broadcast %283 : f32 to vector<2x1xf32>
    %354 = arith.addf %341, %353 : vector<2x1xf32>
    %355 = arith.maximumf %348, %350 : vector<2x1xf32>
    %356 = arith.addf %355, %342 : vector<2x1xf32>
    %357 = arith.maximumf %352, %354 : vector<2x1xf32>
    %358 = arith.addf %357, %343 : vector<2x1xf32>
    %359 = arith.cmpf ogt, %350, %348 : vector<2x1xf32>
    %360 = arith.extui %359 : vector<2x1xi1> to vector<2x1xi32>
    %361 = arith.cmpf ogt, %354, %352 : vector<2x1xf32>
    %362 = arith.extui %361 : vector<2x1xi1> to vector<2x1xi32>
    %363 = arith.select %346, %356, %340 : vector<2x1xi1>, vector<2x1xf32>
    %364 = arith.select %346, %358, %341 : vector<2x1xi1>, vector<2x1xf32>
    %365 = vector.extract_strided_slice %268 {offsets = [0, 4], sizes = [2, 1], strides = [1, 1]} : vector<2x8xf32> to vector<2x1xf32>
    %366 = vector.extract_strided_slice %275 {offsets = [0, 4], sizes = [2, 1], strides = [1, 1]} : vector<2x8xf32> to vector<2x1xf32>
    %367 = vector.extract_strided_slice %2 {offsets = [0, 4], sizes = [2, 1], strides = [1, 1]} : vector<2x8xf32> to vector<2x1xf32>
    %cst_140 = arith.constant 5.000000e-01 : f32
    %368 = vector.broadcast %cst_140 : f32 to vector<2x1xf32>
    %369 = arith.cmpf ogt, %367, %368 : vector<2x1xf32>
    %370 = vector.broadcast %280 : f32 to vector<2x1xf32>
    %371 = arith.addf %363, %370 : vector<2x1xf32>
    %372 = vector.broadcast %282 : f32 to vector<2x1xf32>
    %373 = arith.addf %364, %372 : vector<2x1xf32>
    %374 = vector.broadcast %281 : f32 to vector<2x1xf32>
    %375 = arith.addf %363, %374 : vector<2x1xf32>
    %376 = vector.broadcast %283 : f32 to vector<2x1xf32>
    %377 = arith.addf %364, %376 : vector<2x1xf32>
    %378 = arith.maximumf %371, %373 : vector<2x1xf32>
    %379 = arith.addf %378, %365 : vector<2x1xf32>
    %380 = arith.maximumf %375, %377 : vector<2x1xf32>
    %381 = arith.addf %380, %366 : vector<2x1xf32>
    %382 = arith.cmpf ogt, %373, %371 : vector<2x1xf32>
    %383 = arith.extui %382 : vector<2x1xi1> to vector<2x1xi32>
    %384 = arith.cmpf ogt, %377, %375 : vector<2x1xf32>
    %385 = arith.extui %384 : vector<2x1xi1> to vector<2x1xi32>
    %386 = arith.select %369, %379, %363 : vector<2x1xi1>, vector<2x1xf32>
    %387 = arith.select %369, %381, %364 : vector<2x1xi1>, vector<2x1xf32>
    %388 = vector.extract_strided_slice %268 {offsets = [0, 5], sizes = [2, 1], strides = [1, 1]} : vector<2x8xf32> to vector<2x1xf32>
    %389 = vector.extract_strided_slice %275 {offsets = [0, 5], sizes = [2, 1], strides = [1, 1]} : vector<2x8xf32> to vector<2x1xf32>
    %390 = vector.extract_strided_slice %2 {offsets = [0, 5], sizes = [2, 1], strides = [1, 1]} : vector<2x8xf32> to vector<2x1xf32>
    %cst_141 = arith.constant 5.000000e-01 : f32
    %391 = vector.broadcast %cst_141 : f32 to vector<2x1xf32>
    %392 = arith.cmpf ogt, %390, %391 : vector<2x1xf32>
    %393 = vector.broadcast %280 : f32 to vector<2x1xf32>
    %394 = arith.addf %386, %393 : vector<2x1xf32>
    %395 = vector.broadcast %282 : f32 to vector<2x1xf32>
    %396 = arith.addf %387, %395 : vector<2x1xf32>
    %397 = vector.broadcast %281 : f32 to vector<2x1xf32>
    %398 = arith.addf %386, %397 : vector<2x1xf32>
    %399 = vector.broadcast %283 : f32 to vector<2x1xf32>
    %400 = arith.addf %387, %399 : vector<2x1xf32>
    %401 = arith.maximumf %394, %396 : vector<2x1xf32>
    %402 = arith.addf %401, %388 : vector<2x1xf32>
    %403 = arith.maximumf %398, %400 : vector<2x1xf32>
    %404 = arith.addf %403, %389 : vector<2x1xf32>
    %405 = arith.cmpf ogt, %396, %394 : vector<2x1xf32>
    %406 = arith.extui %405 : vector<2x1xi1> to vector<2x1xi32>
    %407 = arith.cmpf ogt, %400, %398 : vector<2x1xf32>
    %408 = arith.extui %407 : vector<2x1xi1> to vector<2x1xi32>
    %409 = arith.select %392, %402, %386 : vector<2x1xi1>, vector<2x1xf32>
    %410 = arith.select %392, %404, %387 : vector<2x1xi1>, vector<2x1xf32>
    %411 = vector.extract_strided_slice %268 {offsets = [0, 6], sizes = [2, 1], strides = [1, 1]} : vector<2x8xf32> to vector<2x1xf32>
    %412 = vector.extract_strided_slice %275 {offsets = [0, 6], sizes = [2, 1], strides = [1, 1]} : vector<2x8xf32> to vector<2x1xf32>
    %413 = vector.extract_strided_slice %2 {offsets = [0, 6], sizes = [2, 1], strides = [1, 1]} : vector<2x8xf32> to vector<2x1xf32>
    %cst_142 = arith.constant 5.000000e-01 : f32
    %414 = vector.broadcast %cst_142 : f32 to vector<2x1xf32>
    %415 = arith.cmpf ogt, %413, %414 : vector<2x1xf32>
    %416 = vector.broadcast %280 : f32 to vector<2x1xf32>
    %417 = arith.addf %409, %416 : vector<2x1xf32>
    %418 = vector.broadcast %282 : f32 to vector<2x1xf32>
    %419 = arith.addf %410, %418 : vector<2x1xf32>
    %420 = vector.broadcast %281 : f32 to vector<2x1xf32>
    %421 = arith.addf %409, %420 : vector<2x1xf32>
    %422 = vector.broadcast %283 : f32 to vector<2x1xf32>
    %423 = arith.addf %410, %422 : vector<2x1xf32>
    %424 = arith.maximumf %417, %419 : vector<2x1xf32>
    %425 = arith.addf %424, %411 : vector<2x1xf32>
    %426 = arith.maximumf %421, %423 : vector<2x1xf32>
    %427 = arith.addf %426, %412 : vector<2x1xf32>
    %428 = arith.cmpf ogt, %419, %417 : vector<2x1xf32>
    %429 = arith.extui %428 : vector<2x1xi1> to vector<2x1xi32>
    %430 = arith.cmpf ogt, %423, %421 : vector<2x1xf32>
    %431 = arith.extui %430 : vector<2x1xi1> to vector<2x1xi32>
    %432 = arith.select %415, %425, %409 : vector<2x1xi1>, vector<2x1xf32>
    %433 = arith.select %415, %427, %410 : vector<2x1xi1>, vector<2x1xf32>
    %434 = vector.extract_strided_slice %268 {offsets = [0, 7], sizes = [2, 1], strides = [1, 1]} : vector<2x8xf32> to vector<2x1xf32>
    %435 = vector.extract_strided_slice %275 {offsets = [0, 7], sizes = [2, 1], strides = [1, 1]} : vector<2x8xf32> to vector<2x1xf32>
    %436 = vector.extract_strided_slice %2 {offsets = [0, 7], sizes = [2, 1], strides = [1, 1]} : vector<2x8xf32> to vector<2x1xf32>
    %cst_143 = arith.constant 5.000000e-01 : f32
    %437 = vector.broadcast %cst_143 : f32 to vector<2x1xf32>
    %438 = arith.cmpf ogt, %436, %437 : vector<2x1xf32>
    %439 = vector.broadcast %280 : f32 to vector<2x1xf32>
    %440 = arith.addf %432, %439 : vector<2x1xf32>
    %441 = vector.broadcast %282 : f32 to vector<2x1xf32>
    %442 = arith.addf %433, %441 : vector<2x1xf32>
    %443 = vector.broadcast %281 : f32 to vector<2x1xf32>
    %444 = arith.addf %432, %443 : vector<2x1xf32>
    %445 = vector.broadcast %283 : f32 to vector<2x1xf32>
    %446 = arith.addf %433, %445 : vector<2x1xf32>
    %447 = arith.maximumf %440, %442 : vector<2x1xf32>
    %448 = arith.addf %447, %434 : vector<2x1xf32>
    %449 = arith.maximumf %444, %446 : vector<2x1xf32>
    %450 = arith.addf %449, %435 : vector<2x1xf32>
    %451 = arith.cmpf ogt, %442, %440 : vector<2x1xf32>
    %452 = arith.extui %451 : vector<2x1xi1> to vector<2x1xi32>
    %453 = arith.cmpf ogt, %446, %444 : vector<2x1xf32>
    %454 = arith.extui %453 : vector<2x1xi1> to vector<2x1xi32>
    %455 = arith.select %438, %448, %432 : vector<2x1xi1>, vector<2x1xf32>
    %456 = arith.select %438, %450, %433 : vector<2x1xi1>, vector<2x1xf32>
    %457 = vector.broadcast %279 : f32 to vector<2x1xf32>
    %458 = arith.addf %456, %457 : vector<2x1xf32>
    %459 = vector.broadcast %278 : f32 to vector<2x1xf32>
    %460 = arith.addf %455, %459 : vector<2x1xf32>
    %461 = arith.cmpf ogt, %458, %460 : vector<2x1xf32>
    %462 = arith.extui %461 : vector<2x1xi1> to vector<2x1xi32>
    %463 = tpu.iota {dimensions = array<i32: 1>} : vector<2x8xi32>
    %c0_i32_144 = arith.constant 0 : i32
    %464 = vector.broadcast %c0_i32_144 : i32 to vector<2x8xi32>
    %c7_i32 = arith.constant 7 : i32
    %465 = vector.broadcast %c7_i32 : i32 to vector<2x8xi32>
    %466 = arith.cmpi eq, %463, %465 : vector<2x8xi32>
    %467 = arith.extui %466 : vector<2x8xi1> to vector<2x8xi32>
    %468 = vector.broadcast %462 : vector<2x1xi32> to vector<2x8xi32>
    %469 = arith.muli %468, %467 : vector<2x8xi32>
    %470 = arith.addi %464, %469 : vector<2x8xi32>
    %c0_i32_145 = arith.constant 0 : i32
    %471 = vector.broadcast %c0_i32_145 : i32 to vector<2x1xi32>
    %472 = arith.cmpi eq, %462, %471 : vector<2x1xi32>
    %473 = arith.select %472, %452, %454 : vector<2x1xi1>, vector<2x1xi32>
    %c6_i32 = arith.constant 6 : i32
    %474 = vector.broadcast %c6_i32 : i32 to vector<2x1xi32>
    %475 = arith.cmpi sle, %289, %474 : vector<2x1xi32>
    %476 = arith.select %475, %462, %473 : vector<2x1xi1>, vector<2x1xi32>
    %c6_i32_146 = arith.constant 6 : i32
    %477 = vector.broadcast %c6_i32_146 : i32 to vector<2x8xi32>
    %478 = arith.cmpi eq, %463, %477 : vector<2x8xi32>
    %479 = arith.extui %478 : vector<2x8xi1> to vector<2x8xi32>
    %480 = vector.broadcast %476 : vector<2x1xi32> to vector<2x8xi32>
    %481 = arith.muli %480, %479 : vector<2x8xi32>
    %482 = arith.addi %470, %481 : vector<2x8xi32>
    %c0_i32_147 = arith.constant 0 : i32
    %483 = vector.broadcast %c0_i32_147 : i32 to vector<2x1xi32>
    %484 = arith.cmpi eq, %476, %483 : vector<2x1xi32>
    %485 = arith.select %484, %429, %431 : vector<2x1xi1>, vector<2x1xi32>
    %c5_i32 = arith.constant 5 : i32
    %486 = vector.broadcast %c5_i32 : i32 to vector<2x1xi32>
    %487 = arith.cmpi sle, %289, %486 : vector<2x1xi32>
    %488 = arith.select %487, %462, %485 : vector<2x1xi1>, vector<2x1xi32>
    %c5_i32_148 = arith.constant 5 : i32
    %489 = vector.broadcast %c5_i32_148 : i32 to vector<2x8xi32>
    %490 = arith.cmpi eq, %463, %489 : vector<2x8xi32>
    %491 = arith.extui %490 : vector<2x8xi1> to vector<2x8xi32>
    %492 = vector.broadcast %488 : vector<2x1xi32> to vector<2x8xi32>
    %493 = arith.muli %492, %491 : vector<2x8xi32>
    %494 = arith.addi %482, %493 : vector<2x8xi32>
    %c0_i32_149 = arith.constant 0 : i32
    %495 = vector.broadcast %c0_i32_149 : i32 to vector<2x1xi32>
    %496 = arith.cmpi eq, %488, %495 : vector<2x1xi32>
    %497 = arith.select %496, %406, %408 : vector<2x1xi1>, vector<2x1xi32>
    %c4_i32 = arith.constant 4 : i32
    %498 = vector.broadcast %c4_i32 : i32 to vector<2x1xi32>
    %499 = arith.cmpi sle, %289, %498 : vector<2x1xi32>
    %500 = arith.select %499, %462, %497 : vector<2x1xi1>, vector<2x1xi32>
    %c4_i32_150 = arith.constant 4 : i32
    %501 = vector.broadcast %c4_i32_150 : i32 to vector<2x8xi32>
    %502 = arith.cmpi eq, %463, %501 : vector<2x8xi32>
    %503 = arith.extui %502 : vector<2x8xi1> to vector<2x8xi32>
    %504 = vector.broadcast %500 : vector<2x1xi32> to vector<2x8xi32>
    %505 = arith.muli %504, %503 : vector<2x8xi32>
    %506 = arith.addi %494, %505 : vector<2x8xi32>
    %c0_i32_151 = arith.constant 0 : i32
    %507 = vector.broadcast %c0_i32_151 : i32 to vector<2x1xi32>
    %508 = arith.cmpi eq, %500, %507 : vector<2x1xi32>
    %509 = arith.select %508, %383, %385 : vector<2x1xi1>, vector<2x1xi32>
    %c3_i32 = arith.constant 3 : i32
    %510 = vector.broadcast %c3_i32 : i32 to vector<2x1xi32>
    %511 = arith.cmpi sle, %289, %510 : vector<2x1xi32>
    %512 = arith.select %511, %462, %509 : vector<2x1xi1>, vector<2x1xi32>
    %c3_i32_152 = arith.constant 3 : i32
    %513 = vector.broadcast %c3_i32_152 : i32 to vector<2x8xi32>
    %514 = arith.cmpi eq, %463, %513 : vector<2x8xi32>
    %515 = arith.extui %514 : vector<2x8xi1> to vector<2x8xi32>
    %516 = vector.broadcast %512 : vector<2x1xi32> to vector<2x8xi32>
    %517 = arith.muli %516, %515 : vector<2x8xi32>
    %518 = arith.addi %506, %517 : vector<2x8xi32>
    %c0_i32_153 = arith.constant 0 : i32
    %519 = vector.broadcast %c0_i32_153 : i32 to vector<2x1xi32>
    %520 = arith.cmpi eq, %512, %519 : vector<2x1xi32>
    %521 = arith.select %520, %360, %362 : vector<2x1xi1>, vector<2x1xi32>
    %c2_i32 = arith.constant 2 : i32
    %522 = vector.broadcast %c2_i32 : i32 to vector<2x1xi32>
    %523 = arith.cmpi sle, %289, %522 : vector<2x1xi32>
    %524 = arith.select %523, %462, %521 : vector<2x1xi1>, vector<2x1xi32>
    %c2_i32_154 = arith.constant 2 : i32
    %525 = vector.broadcast %c2_i32_154 : i32 to vector<2x8xi32>
    %526 = arith.cmpi eq, %463, %525 : vector<2x8xi32>
    %527 = arith.extui %526 : vector<2x8xi1> to vector<2x8xi32>
    %528 = vector.broadcast %524 : vector<2x1xi32> to vector<2x8xi32>
    %529 = arith.muli %528, %527 : vector<2x8xi32>
    %530 = arith.addi %518, %529 : vector<2x8xi32>
    %c0_i32_155 = arith.constant 0 : i32
    %531 = vector.broadcast %c0_i32_155 : i32 to vector<2x1xi32>
    %532 = arith.cmpi eq, %524, %531 : vector<2x1xi32>
    %533 = arith.select %532, %337, %339 : vector<2x1xi1>, vector<2x1xi32>
    %c1_i32_156 = arith.constant 1 : i32
    %534 = vector.broadcast %c1_i32_156 : i32 to vector<2x1xi32>
    %535 = arith.cmpi sle, %289, %534 : vector<2x1xi32>
    %536 = arith.select %535, %462, %533 : vector<2x1xi1>, vector<2x1xi32>
    %c1_i32_157 = arith.constant 1 : i32
    %537 = vector.broadcast %c1_i32_157 : i32 to vector<2x8xi32>
    %538 = arith.cmpi eq, %463, %537 : vector<2x8xi32>
    %539 = arith.extui %538 : vector<2x8xi1> to vector<2x8xi32>
    %540 = vector.broadcast %536 : vector<2x1xi32> to vector<2x8xi32>
    %541 = arith.muli %540, %539 : vector<2x8xi32>
    %542 = arith.addi %530, %541 : vector<2x8xi32>
    %c0_i32_158 = arith.constant 0 : i32
    %543 = vector.broadcast %c0_i32_158 : i32 to vector<2x1xi32>
    %544 = arith.cmpi eq, %536, %543 : vector<2x1xi32>
    %545 = arith.select %544, %314, %316 : vector<2x1xi1>, vector<2x1xi32>
    %c0_i32_159 = arith.constant 0 : i32
    %546 = vector.broadcast %c0_i32_159 : i32 to vector<2x1xi32>
    %547 = arith.cmpi sle, %289, %546 : vector<2x1xi32>
    %548 = arith.select %547, %462, %545 : vector<2x1xi1>, vector<2x1xi32>
    %c0_i32_160 = arith.constant 0 : i32
    %549 = vector.broadcast %c0_i32_160 : i32 to vector<2x8xi32>
    %550 = arith.cmpi eq, %463, %549 : vector<2x8xi32>
    %551 = arith.extui %550 : vector<2x8xi1> to vector<2x8xi32>
    %552 = vector.broadcast %548 : vector<2x1xi32> to vector<2x8xi32>
    %553 = arith.muli %552, %551 : vector<2x8xi32>
    %554 = arith.addi %542, %553 : vector<2x8xi32>
    %c0_161 = arith.constant 0 : index
    %c0_162 = arith.constant 0 : index
    %555 = vector.load %arg20[%c0_161, %c0_162] : memref<2x8xi32, #tpu.memory_space<vmem>>, vector<2x8xi32>
    tpu.vector_store %arg20[%c0_161, %c0_162], %554 {strides = array<i32>} : memref<2x8xi32, #tpu.memory_space<vmem>>, vector<2x8xi32>,
    return
  }
}

</mosaic_0001>

<llo_original>
// kernel: _decode_impl.1
$region0: #{_decode_impl.1}
  #allocation0 [shape = 'u32[]', space=smem, size = 0x4, offset = 0x4, fixed_abs, tag = 'smem constant byte address 0x4 - core index']
  #allocation1 [shape = 'u32[144,128]{1,0:T(1,128)}', space=vmem, size = 0x12000, scoped, tag = 'internal scratch']
  #allocation2 [shape = 's32[1]{0:T(128)S(6)}', space=smem, size = 0x200, scoped, tag = 'scoped memory for _decode_impl.1']
  %s0 = inlined_call_operand.<no memory space> [shape: s32[1], index: 0, kind: input, shape index: {}]
  %s1 = inlined_call_operand.vmem [shape: f32[2], index: 1, kind: input, shape index: {}]
  %s2 = inlined_call_operand.vmem [shape: f32[2], index: 2, kind: input, shape index: {}]
  %s3 = inlined_call_operand.vmem [shape: f32[2], index: 3, kind: input, shape index: {}]
  %s4 = inlined_call_operand.vmem [shape: f32[4], index: 4, kind: input, shape index: {}]
  %s5 = inlined_call_operand.vmem [shape: f32[2,8,32], index: 5, kind: input, shape index: {}]
  %s6 = inlined_call_operand.vmem [shape: s32[2,8], index: 6, kind: input, shape index: {}]
  %s7 = inlined_call_operand.vmem [shape: bf16[2,32,96], index: 7, kind: input, shape index: {}]
  %s8 = inlined_call_operand.vmem [shape: f32[2,1,96], index: 8, kind: input, shape index: {}]
  %s9 = inlined_call_operand.vmem [shape: bf16[2,32,32], index: 9, kind: input, shape index: {}]
  %s10 = inlined_call_operand.vmem [shape: f32[2,1,32], index: 10, kind: input, shape index: {}, may-alias: {10,12,16,18}]
  %s11 = inlined_call_operand.vmem [shape: f32[2,1,32], index: 11, kind: input, shape index: {}, may-alias: {11,17}]
  %s12 = inlined_call_operand.vmem [shape: f32[2,1,32], index: 12, kind: input, shape index: {}, may-alias: {10,12,16,18}]
  %s13 = inlined_call_operand.vmem [shape: bf16[2,32,64], index: 13, kind: input, shape index: {}]
  %s14 = inlined_call_operand.vmem [shape: f32[2,1,64], index: 14, kind: input, shape index: {}]
  %s15 = inlined_call_operand.vmem [shape: bf16[2,64,32], index: 15, kind: input, shape index: {}]
  %s16 = inlined_call_operand.vmem [shape: f32[2,1,32], index: 16, kind: input, shape index: {}, may-alias: {10,12,16,18}]
  %s17 = inlined_call_operand.vmem [shape: f32[2,1,32], index: 17, kind: input, shape index: {}, may-alias: {11,17}]
  %s18 = inlined_call_operand.vmem [shape: f32[2,1,32], index: 18, kind: input, shape index: {}, may-alias: {10,12,16,18}]
  %s19 = inlined_call_operand.vmem [shape: f32[2,32], index: 19, kind: input, shape index: {}]
  %s20 = inlined_call_operand.hbm [shape: s32[2,8], index: 20, kind: output, shape index: {}]
  %s21 = sld [smem:[#allocation0]]
  $region106: #{_decode_impl.1} parent=0
    _
  %s23 = ssub.s32 1, %s21
  %s24 = scalar_select 0, %s23, %s21
  %25 = sst [smem:[#allocation2]] %s0
  $region1: #{_decode_impl.1} parent=0
    #allocation3 [shape = 'u8[512]{0}', space=smem, size = 0x200, scoped, tag = 'input window, operand 1, single buffered']
    #allocation4 [shape = 's32[1]{0}', space=sflag, size = 0x4, scoped, tag = 'scoped memory for _decode_impl.1']
    #allocation5 [shape = 's32[1]{0}', space=sflag, size = 0x4, scoped, tag = 'scoped memory for _decode_impl.1']
    #allocation6 [shape = 'u8[512]{0}', space=smem, size = 0x200, scoped, tag = 'input window, operand 2, single buffered']
    #allocation7 [shape = 's32[1]{0}', space=sflag, size = 0x4, scoped, tag = 'scoped memory for _decode_impl.1']
    #allocation8 [shape = 'u8[512]{0}', space=smem, size = 0x200, scoped, tag = 'input window, operand 3, single buffered']
    #allocation9 [shape = 'u8[512]{0}', space=smem, size = 0x200, scoped, tag = 'input window, operand 4, single buffered']
    #allocation10 [shape = 's32[1]{0}', space=sflag, size = 0x4, scoped, tag = 'scoped memory for _decode_impl.1']
    #allocation11 [shape = 'u8[1024]{0}', space=vmem, size = 0x400, scoped, tag = 'output window, operand 0, single buffered']
    %26 = vsyncpa [#allocation5], 0
    %27 = vsyncpa [#allocation7], 0
    %28 = vsyncpa [#allocation10], 0
    %29 = vsyncpa [#allocation4], 0
    // Predicated region
    $region2: #{_decode_impl.1} parent=1 // pred_check
      _
    $region3: #{_decode_impl.1} parent=1 // pred_check_branch
      %31 = sbr.rel (0) target = $region5
    $region4: #{_decode_impl.1} parent=1 // pred_region
      _
    $region5: #{_decode_impl.1} parent=1 // pred_fallthru
      _
    // Predicated region
    $region6: #{_decode_impl.1} parent=1 // pred_check
      _
    $region7: #{_decode_impl.1} parent=1 // pred_check_branch
      %33 = sbr.rel (0) target = $region9
    $region8: #{_decode_impl.1} parent=1 // pred_region
      %s35 = ssub.s32 16, 16
      %36 = vsyncadd [#allocation5], %s35
      %s38 = sshll.u32 %s1, 4
      %s39 = int_to_ptr.vmem [resolvable:$true] %s38
      %41 = dma.vmem_to_smem %s39, 16, [#allocation3], [#allocation5]
    $region9: #{_decode_impl.1} parent=1 // pred_fallthru
      _
    // Predicated region
    $region10: #{_decode_impl.1} parent=1 // pred_check
      _
    $region11: #{_decode_impl.1} parent=1 // pred_check_branch
      %43 = sbr.rel (0) target = $region13
    $region12: #{_decode_impl.1} parent=1 // pred_region
      %s45 = ssub.s32 16, 16
      %46 = vsyncadd [#allocation7], %s45
      %s48 = sshll.u32 %s2, 4
      %s49 = int_to_ptr.vmem [resolvable:$true] %s48
      %51 = dma.vmem_to_smem %s49, 16, [#allocation6], [#allocation7]
    $region13: #{_decode_impl.1} parent=1 // pred_fallthru
      _
    // Predicated region
    $region14: #{_decode_impl.1} parent=1 // pred_check
      _
    $region15: #{_decode_impl.1} parent=1 // pred_check_branch
      %53 = sbr.rel (0) target = $region17
    $region16: #{_decode_impl.1} parent=1 // pred_region
      %s55 = ssub.s32 16, 16
      %56 = vsyncadd [#allocation7], %s55
      %s58 = sshll.u32 %s3, 4
      %s59 = int_to_ptr.vmem [resolvable:$true] %s58
      %61 = dma.vmem_to_smem %s59, 16, [#allocation8], [#allocation7]
    $region17: #{_decode_impl.1} parent=1 // pred_fallthru
      _
    // Predicated region
    $region18: #{_decode_impl.1} parent=1 // pred_check
      _
    $region19: #{_decode_impl.1} parent=1 // pred_check_branch
      %63 = sbr.rel (0) target = $region21
    $region20: #{_decode_impl.1} parent=1 // pred_region
      %s65 = ssub.s32 16, 16
      %66 = vsyncadd [#allocation10], %s65
      %s68 = sshll.u32 %s4, 4
      %s69 = int_to_ptr.vmem [resolvable:$true] %s68
      %71 = dma.vmem_to_smem %s69, 16, [#allocation9], [#allocation10]
    $region21: #{_decode_impl.1} parent=1 // pred_fallthru
      _
    // Predicated region
    $region22: #{_decode_impl.1} parent=1 // pred_check
      _
    $region23: #{_decode_impl.1} parent=1 // pred_check_branch
      %73 = sbr.rel (0) target = $region25
    $region24: #{_decode_impl.1} parent=1 // pred_region
      _
    $region25: #{_decode_impl.1} parent=1 // pred_fallthru
      _
    // Predicated region
    $region26: #{_decode_impl.1} parent=1 // pred_check
      _
    $region27: #{_decode_impl.1} parent=1 // pred_check_branch
      %75 = sbr.rel (0) target = $region29
    $region28: #{_decode_impl.1} parent=1 // pred_region
      _
    $region29: #{_decode_impl.1} parent=1 // pred_fallthru
      _
    // Predicated region
    $region30: #{_decode_impl.1} parent=1 // pred_check
      _
    $region31: #{_decode_impl.1} parent=1 // pred_check_branch
      %77 = sbr.rel (0) target = $region33
    $region32: #{_decode_impl.1} parent=1 // pred_region
      _
    $region33: #{_decode_impl.1} parent=1 // pred_fallthru
      _
    // Predicated region
    $region34: #{_decode_impl.1} parent=1 // pred_check
      _
    $region35: #{_decode_impl.1} parent=1 // pred_check_branch
      %79 = sbr.rel (0) target = $region37
    $region36: #{_decode_impl.1} parent=1 // pred_region
      _
    $region37: #{_decode_impl.1} parent=1 // pred_fallthru
      _
    // Predicated region
    $region38: #{_decode_impl.1} parent=1 // pred_check
      _
    $region39: #{_decode_impl.1} parent=1 // pred_check_branch
      %81 = sbr.rel (0) target = $region41
    $region40: #{_decode_impl.1} parent=1 // pred_region
      _
    $region41: #{_decode_impl.1} parent=1 // pred_fallthru
      _
    // Predicated region
    $region42: #{_decode_impl.1} parent=1 // pred_check
      _
    $region43: #{_decode_impl.1} parent=1 // pred_check_branch
      %83 = sbr.rel (0) target = $region45
    $region44: #{_decode_impl.1} parent=1 // pred_region
      _
    $region45: #{_decode_impl.1} parent=1 // pred_fallthru
      _
    // Predicated region
    $region46: #{_decode_impl.1} parent=1 // pred_check
      _
    $region47: #{_decode_impl.1} parent=1 // pred_check_branch
      %85 = sbr.rel (0) target = $region49
    $region48: #{_decode_impl.1} parent=1 // pred_region
      _
    $region49: #{_decode_impl.1} parent=1 // pred_fallthru
      _
    // Predicated region
    $region50: #{_decode_impl.1} parent=1 // pred_check
      _
    $region51: #{_decode_impl.1} parent=1 // pred_check_branch
      %87 = sbr.rel (0) target = $region53
    $region52: #{_decode_impl.1} parent=1 // pred_region
      _
    $region53: #{_decode_impl.1} parent=1 // pred_fallthru
      _
    // Predicated region
    $region54: #{_decode_impl.1} parent=1 // pred_check
      _
    $region55: #{_decode_impl.1} parent=1 // pred_check_branch
      %89 = sbr.rel (0) target = $region57
    $region56: #{_decode_impl.1} parent=1 // pred_region
      _
    $region57: #{_decode_impl.1} parent=1 // pred_fallthru
      _
    // Predicated region
    $region58: #{_decode_impl.1} parent=1 // pred_check
      _
    $region59: #{_decode_impl.1} parent=1 // pred_check_branch
      %91 = sbr.rel (0) target = $region61
    $region60: #{_decode_impl.1} parent=1 // pred_region
      _
    $region61: #{_decode_impl.1} parent=1 // pred_fallthru
      _
    // Predicated region
    $region62: #{_decode_impl.1} parent=1 // pred_check
      _
    $region63: #{_decode_impl.1} parent=1 // pred_check_branch
      %93 = sbr.rel (0) target = $region65
    $region64: #{_decode_impl.1} parent=1 // pred_region
      _
    $region65: #{_decode_impl.1} parent=1 // pred_fallthru
      _
    // Predicated region
    $region66: #{_decode_impl.1} parent=1 // pred_check
      _
    $region67: #{_decode_impl.1} parent=1 // pred_check_branch
      %95 = sbr.rel (0) target = $region69
    $region68: #{_decode_impl.1} parent=1 // pred_region
      _
    $region69: #{_decode_impl.1} parent=1 // pred_fallthru
      _
    // Predicated region
    $region70: #{_decode_impl.1} parent=1 // pred_check
      _
    $region71: #{_decode_impl.1} parent=1 // pred_check_branch
      %97 = sbr.rel (0) target = $region73
    $region72: #{_decode_impl.1} parent=1 // pred_region
      _
    $region73: #{_decode_impl.1} parent=1 // pred_fallthru
      _
    // Predicated region
    $region74: #{_decode_impl.1} parent=1 // pred_check
      _
    $region75: #{_decode_impl.1} parent=1 // pred_check_branch
      %99 = sbr.rel (0) target = $region77
    $region76: #{_decode_impl.1} parent=1 // pred_region
      _
    $region77: #{_decode_impl.1} parent=1 // pred_fallthru
      _
    // Predicated region
    $region78: #{_decode_impl.1} parent=1 // pred_check
      _
    $region79: #{_decode_impl.1} parent=1 // pred_check_branch
      %101 = sbr.rel (0) target = $region81
    $region80: #{_decode_impl.1} parent=1 // pred_region
      _
    $region81: #{_decode_impl.1} parent=1 // pred_fallthru
      _
    // Predicated region
    $region82: #{_decode_impl.1} parent=1 // pred_check
      _
    $region83: #{_decode_impl.1} parent=1 // pred_check_branch
      %103 = sbr.rel (0) target = $region85
    $region84: #{_decode_impl.1} parent=1 // pred_region
      %104 = dma.done [#allocation5], 16
    $region85: #{_decode_impl.1} parent=1 // pred_fallthru
      _
    // Predicated region
    $region86: #{_decode_impl.1} parent=1 // pred_check
      _
    $region87: #{_decode_impl.1} parent=1 // pred_check_branch
      %106 = sbr.rel (0) target = $region89
    $region88: #{_decode_impl.1} parent=1 // pred_region
      %107 = dma.done [#allocation7], 16
    $region89: #{_decode_impl.1} parent=1 // pred_fallthru
      _
    // Predicated region
    $region90: #{_decode_impl.1} parent=1 // pred_check
      _
    $region91: #{_decode_impl.1} parent=1 // pred_check_branch
      %109 = sbr.rel (0) target = $region93
    $region92: #{_decode_impl.1} parent=1 // pred_region
      %110 = dma.done [#allocation7], 16
    $region93: #{_decode_impl.1} parent=1 // pred_fallthru
      _
    // Predicated region
    $region94: #{_decode_impl.1} parent=1 // pred_check
      _
    $region95: #{_decode_impl.1} parent=1 // pred_check_branch
      %112 = sbr.rel (0) target = $region97
    $region96: #{_decode_impl.1} parent=1 // pred_region
      %113 = dma.done [#allocation10], 16
    $region97: #{_decode_impl.1} parent=1 // pred_fallthru
      _
    %114 = sfence
    %v116 = vld [vmem:[%s5] sm:$0xff]
    %v117 = vld [vmem:[%s5 + $0x8] sm:$0xff]
    %v118 = vld [vmem:[%s6] sm:$0x3]
    %v119 = vcvt.s32.f32 %v118
    %v120 = vsub.f32 1.0, %v119
    %v121 = vmul.f32 %v120, -1e+09
    %v124 = vunpack.c.l.s4 1966171168
    %v125 = vunpack.c.0.s8 %v124
    %v126 = vlaneseq
    %v127 = vshrl.u32 %v126, 7
    %v128 = vsub.s32 %v125, %v127
    %v129 = vrot.slane %v121, %v128
    %v130 = vcombine.high %v129, %v129
    %v132 = vunpack.c.l.s4 1966171168
    %v133 = vunpack.c.0.s8 %v132
    %v134 = vlaneseq
    %v135 = vshrl.u32 %v134, 7
    %v136 = vsub.s32 %v133, %v135
    %v137 = vrot.slane %v129, %v136
    %v139 = vunpack.c.l.s4 1966171168
    %v140 = vunpack.c.0.s8 %v139
    %v141 = vlaneseq
    %v142 = vshrl.u32 %v141, 7
    %v143 = vsub.s32 %v140, %v142
    %v144 = vrot.slane %v130, %v143
    %v145 = vlaneseq
    %v146 = vshrl.u32 %v145, 7
    %v147 = vsub.s32 0, %v146
    %v148 = vrot.slane %v137, %v147
    %v149 = vlaneseq
    %v150 = vshrl.u32 %v149, 7
    %v151 = vsub.s32 0, %v150
    %v152 = vrot.slane %v144, %v151
    %v155 = vpack.c.bf16 %v117, %v116
    %v156 = vld [vmem:[%s7] sm:$0xf]
    %v157 = vld [vmem:[%s7 + $0x4] sm:$0xf]
    %v158 = vld [vmem:[%s7 + $0x8] sm:$0xf]
    %v159 = vld [vmem:[%s7 + $0xc] sm:$0xf]
    %v160 = vld [vmem:[%s8] sm:$0x1]
    %v162 = vlaneseq
    %v163 = vshrl.u32 %v162, 7
    %v164 = vsub.s32 0, %v163
    %v165 = vrot.slane %v160, %v164
    %v171 = vunpack.c.l.b16 %v156
    %v172 = vunpack.c.l.b16 %v157
    %v173 = vunpack.c.l.b16 %v158
    %v174 = vunpack.c.l.b16 %v159
    %v175 = vpack.c.b16 %v172, %v171
    %v176 = vpack.c.b16 %v174, %v173
    %vm179 = vcmask 261120
    %v181 = vsel %vm179, %v155, 0
    %183 = vmatprep.subr.bf16.mxu0 0
    %184 = vmatpush1.bf16.msra.mxu0 %v175
    %185 = vmatprep.subr.bf16.mxu0 0
    %186 = vmatpush1.bf16.msra.mxu0 %v176
    %187 = vmatprep.subr.bf16.mxu0 0
    %188 = vmatpush1.bf16.msra.mxu0 0
    %189 = vmatprep.subr.bf16.mxu0 0
    %190 = vmatpush1.bf16.msra.mxu0 0
    %191 = vmatprep.subr.bf16.mxu0 0
    %192 = vmatpush1.bf16.msra.mxu0 0
    %193 = vmatprep.subr.bf16.mxu0 0
    %194 = vmatpush1.bf16.msra.mxu0 0
    %195 = vmatprep.subr.bf16.mxu0 0
    %196 = vmatpush1.bf16.msra.mxu0 0
    %197 = vmatprep.subr.bf16.mxu0 0
    %198 = vmatpush1.bf16.msra.mxu0 0
    %199 = vmatprep.subr.bf16.mxu0 0
    %200 = vmatpush1.bf16.msra.mxu0 0
    %201 = vmatprep.subr.bf16.mxu0 0
    %202 = vmatpush1.bf16.msra.mxu0 0
    %203 = vmatprep.subr.bf16.mxu0 0
    %204 = vmatpush1.bf16.msra.mxu0 0
    %205 = vmatprep.subr.bf16.mxu0 0
    %206 = vmatpush1.bf16.msra.mxu0 0
    %207 = vmatprep.subr.bf16.mxu0 0
    %208 = vmatpush1.bf16.msra.mxu0 0
    %209 = vmatprep.subr.bf16.mxu0 0
    %210 = vmatpush1.bf16.msra.mxu0 0
    %211 = vmatprep.subr.bf16.mxu0 0
    %212 = vmatpush1.bf16.msra.mxu0 0
    %213 = vmatprep.subr.bf16.mxu0 0
    %214 = vmatpush1.bf16.msra.mxu0 0
    %215 = vmatprep.mubr.bf16.mxu0 0
    %216 = vmatmul.mubr.bf16.gmra.mrb[0].mxu0 %v181
    %v217 = vpop.f32.mrb[0].mxu0
    %v218 = vadd.f32 %v165, %v217
    %v219 = vpop.f32.mrb[0].mxu0
    %v220 = vpop.f32.mrb[0].mxu0
    %v221 = vadd.f32 %v165, %v220
    %v222 = vpop.f32.mrb[0].mxu0
    %223 = vdwg.mxu0
    %v224 = vpack.c.bf16 %v218, %v218
    %v225 = vpack.c.bf16 %v221, %v221
    %227 = vrot.lane.b32.xlu0 %v224, 96
    %v228 = vpop.permute.xlu0 %227
    %v230 = vsel %vm179, %v224, 0
    %v233 = vsel %vm179, %v228, 0
    %235 = vmatprep.subr.bf16.mxu0 0
    %236 = vmatpush1.bf16.xpose.msra.mxu0 %v233
    %237 = vmatprep.subr.bf16.mxu0 0
    %238 = vmatpush1.bf16.xpose.msra.mxu0 0
    %239 = vmatprep.subr.bf16.mxu0 0
    %240 = vmatpush1.bf16.xpose.msra.mxu0 0
    %241 = vmatprep.subr.bf16.mxu0 0
    %242 = vmatpush1.bf16.xpose.msra.mxu0 0
    %243 = vmatprep.subr.bf16.mxu0 0
    %244 = vmatpush1.bf16.xpose.msra.mxu0 0
    %245 = vmatprep.subr.bf16.mxu0 0
    %246 = vmatpush1.bf16.xpose.msra.mxu0 0
    %247 = vmatprep.subr.bf16.mxu0 0
    %248 = vmatpush1.bf16.xpose.msra.mxu0 0
    %249 = vmatprep.subr.bf16.mxu0 0
    %250 = vmatpush1.bf16.xpose.msra.mxu0 0
    %251 = vmatprep.subr.bf16.mxu0 0
    %252 = vmatpush1.bf16.xpose.msra.mxu0 0
    %253 = vmatprep.subr.bf16.mxu0 0
    %254 = vmatpush1.bf16.xpose.msra.mxu0 0
    %255 = vmatprep.subr.bf16.mxu0 0
    %256 = vmatpush1.bf16.xpose.msra.mxu0 0
    %257 = vmatprep.subr.bf16.mxu0 0
    %258 = vmatpush1.bf16.xpose.msra.mxu0 0
    %259 = vmatprep.subr.bf16.mxu0 0
    %260 = vmatpush1.bf16.xpose.msra.mxu0 0
    %261 = vmatprep.subr.bf16.mxu0 0
    %262 = vmatpush1.bf16.xpose.msra.mxu0 0
    %263 = vmatprep.subr.bf16.mxu0 0
    %264 = vmatpush1.bf16.xpose.msra.mxu0 0
    %265 = vmatprep.subr.bf16.mxu0 0
    %266 = vmatpush1.bf16.xpose.msra.mxu0 0
    %267 = vmatprep.mubr.bf16.mxu0 0
    %268 = vmatmul.mubr.bf16.gmra.mrb[0].mxu0 %v230
    %v269 = vpop.f32.mrb[0].mxu0
    %v270 = vadd.f32 0.0, %v269
    %v271 = vpop.f32.mrb[0].mxu0
    %v272 = vpop.f32.mrb[0].mxu0
    %v273 = vpop.f32.mrb[0].mxu0
    %274 = vdwg.mxu0
    %276 = vrot.lane.b32.xlu0 %v225, 96
    %v277 = vpop.permute.xlu0 %276
    %v279 = vsel %vm179, %v225, 0
    %v282 = vsel %vm179, %v277, 0
    %284 = vmatprep.subr.bf16.mxu0 0
    %285 = vmatpush1.bf16.xpose.msra.mxu0 %v282
    %286 = vmatprep.subr.bf16.mxu0 0
    %287 = vmatpush1.bf16.xpose.msra.mxu0 0
    %288 = vmatprep.subr.bf16.mxu0 0
    %289 = vmatpush1.bf16.xpose.msra.mxu0 0
    %290 = vmatprep.subr.bf16.mxu0 0
    %291 = vmatpush1.bf16.xpose.msra.mxu0 0
    %292 = vmatprep.subr.bf16.mxu0 0
    %293 = vmatpush1.bf16.xpose.msra.mxu0 0
    %294 = vmatprep.subr.bf16.mxu0 0
    %295 = vmatpush1.bf16.xpose.msra.mxu0 0
    %296 = vmatprep.subr.bf16.mxu0 0
    %297 = vmatpush1.bf16.xpose.msra.mxu0 0
    %298 = vmatprep.subr.bf16.mxu0 0
    %299 = vmatpush1.bf16.xpose.msra.mxu0 0
    %300 = vmatprep.subr.bf16.mxu0 0
    %301 = vmatpush1.bf16.xpose.msra.mxu0 0
    %302 = vmatprep.subr.bf16.mxu0 0
    %303 = vmatpush1.bf16.xpose.msra.mxu0 0
    %304 = vmatprep.subr.bf16.mxu0 0
    %305 = vmatpush1.bf16.xpose.msra.mxu0 0
    %306 = vmatprep.subr.bf16.mxu0 0
    %307 = vmatpush1.bf16.xpose.msra.mxu0 0
    %308 = vmatprep.subr.bf16.mxu0 0
    %309 = vmatpush1.bf16.xpose.msra.mxu0 0
    %310 = vmatprep.subr.bf16.mxu0 0
    %311 = vmatpush1.bf16.xpose.msra.mxu0 0
    %312 = vmatprep.subr.bf16.mxu0 0
    %313 = vmatpush1.bf16.xpose.msra.mxu0 0
    %314 = vmatprep.subr.bf16.mxu0 0
    %315 = vmatpush1.bf16.xpose.msra.mxu0 0
    %316 = vmatprep.mubr.bf16.mxu0 0
    %317 = vmatmul.mubr.bf16.gmra.mrb[0].mxu0 %v279
    %v318 = vpop.f32.mrb[0].mxu0
    %v319 = vadd.f32 0.0, %v318
    %v320 = vpop.f32.mrb[0].mxu0
    %v321 = vpop.f32.mrb[0].mxu0
    %v322 = vpop.f32.mrb[0].mxu0
    %323 = vdwg.mxu0
    %v324 = vmul.f32 %v270, 0.17677669
    %v325 = vmul.f32 %v319, 0.17677669
    %v326 = vadd.f32 %v324, %v148
    %v327 = vadd.f32 %v325, %v152
    %vm328 = vcmask 64512
    %v329 = vsel %vm328, %v326, -inf
    %330 = vmax.xlane.f32.xlu0 %v329
    %v331 = vpop.xlane.xlu0 %330
    %v332 = vsel %vm328, %v327, -inf
    %333 = vmax.xlane.f32.xlu0 %v332
    %v334 = vpop.xlane.xlu0 %333
    %v335 = vsub.f32 %v326, %v331
    %v336 = vsub.f32 %v327, %v334
    %v337 = vmul.f32 %v335, 1.442695
    %v338 = vpow.pop %v337
    %v339 = vmul.f32 %v336, 1.442695
    %v340 = vpow.pop %v339
    %v341 = vsel %vm328, %v338, 0.0
    %342 = vadd.xlane.f32.xlu0 %v341
    %v343 = vpop.xlane.xlu0 %342
    %v344 = vsel %vm328, %v340, 0.0
    %345 = vadd.xlane.f32.xlu0 %v344
    %v346 = vpop.xlane.xlu0 %345
    %v347 = vrcp.pop %v343
    %v348 = vmul.f32 %v338, %v347
    %v349 = vrcp.pop %v346
    %v350 = vmul.f32 %v340, %v349
    %v351 = vpack.c.bf16 %v348, %v348
    %v352 = vpack.c.bf16 %v350, %v350
    %353 = vrot.lane.b32.xlu0 %v224, 64
    %v354 = vpop.permute.xlu0 %353
    %v356 = vsel %vm328, %v351, 0
    %vm358 = vcmask 1043456
    %v360 = vsel %vm358, %v354, 0
    %362 = vmatprep.subr.bf16.mxu0 0
    %363 = vmatpush1.bf16.msra.mxu0 %v360
    %364 = vmatprep.subr.bf16.mxu0 0
    %365 = vmatpush1.bf16.msra.mxu0 0
    %366 = vmatprep.subr.bf16.mxu0 0
    %367 = vmatpush1.bf16.msra.mxu0 0
    %368 = vmatprep.subr.bf16.mxu0 0
    %369 = vmatpush1.bf16.msra.mxu0 0
    %370 = vmatprep.subr.bf16.mxu0 0
    %371 = vmatpush1.bf16.msra.mxu0 0
    %372 = vmatprep.subr.bf16.mxu0 0
    %373 = vmatpush1.bf16.msra.mxu0 0
    %374 = vmatprep.subr.bf16.mxu0 0
    %375 = vmatpush1.bf16.msra.mxu0 0
    %376 = vmatprep.subr.bf16.mxu0 0
    %377 = vmatpush1.bf16.msra.mxu0 0
    %378 = vmatprep.subr.bf16.mxu0 0
    %379 = vmatpush1.bf16.msra.mxu0 0
    %380 = vmatprep.subr.bf16.mxu0 0
    %381 = vmatpush1.bf16.msra.mxu0 0
    %382 = vmatprep.subr.bf16.mxu0 0
    %383 = vmatpush1.bf16.msra.mxu0 0
    %384 = vmatprep.subr.bf16.mxu0 0
    %385 = vmatpush1.bf16.msra.mxu0 0
    %386 = vmatprep.subr.bf16.mxu0 0
    %387 = vmatpush1.bf16.msra.mxu0 0
    %388 = vmatprep.subr.bf16.mxu0 0
    %389 = vmatpush1.bf16.msra.mxu0 0
    %390 = vmatprep.subr.bf16.mxu0 0
    %391 = vmatpush1.bf16.msra.mxu0 0
    %392 = vmatprep.subr.bf16.mxu0 0
    %393 = vmatpush1.bf16.msra.mxu0 0
    %394 = vmatprep.mubr.bf16.mxu0 0
    %395 = vmatmul.mubr.bf16.gmra.mrb[0].mxu0 %v356
    %v396 = vpop.f32.mrb[0].mxu0
    %v397 = vadd.f32 0.0, %v396
    %v398 = vpop.f32.mrb[0].mxu0
    %v399 = vpop.f32.mrb[0].mxu0
    %v400 = vpop.f32.mrb[0].mxu0
    %401 = vdwg.mxu0
    %402 = vrot.lane.b32.xlu0 %v225, 64
    %v403 = vpop.permute.xlu0 %402
    %v405 = vsel %vm328, %v352, 0
    %v408 = vsel %vm358, %v403, 0
    %410 = vmatprep.subr.bf16.mxu0 0
    %411 = vmatpush1.bf16.msra.mxu0 %v408
    %412 = vmatprep.subr.bf16.mxu0 0
    %413 = vmatpush1.bf16.msra.mxu0 0
    %414 = vmatprep.subr.bf16.mxu0 0
    %415 = vmatpush1.bf16.msra.mxu0 0
    %416 = vmatprep.subr.bf16.mxu0 0
    %417 = vmatpush1.bf16.msra.mxu0 0
    %418 = vmatprep.subr.bf16.mxu0 0
    %419 = vmatpush1.bf16.msra.mxu0 0
    %420 = vmatprep.subr.bf16.mxu0 0
    %421 = vmatpush1.bf16.msra.mxu0 0
    %422 = vmatprep.subr.bf16.mxu0 0
    %423 = vmatpush1.bf16.msra.mxu0 0
    %424 = vmatprep.subr.bf16.mxu0 0
    %425 = vmatpush1.bf16.msra.mxu0 0
    %426 = vmatprep.subr.bf16.mxu0 0
    %427 = vmatpush1.bf16.msra.mxu0 0
    %428 = vmatprep.subr.bf16.mxu0 0
    %429 = vmatpush1.bf16.msra.mxu0 0
    %430 = vmatprep.subr.bf16.mxu0 0
    %431 = vmatpush1.bf16.msra.mxu0 0
    %432 = vmatprep.subr.bf16.mxu0 0
    %433 = vmatpush1.bf16.msra.mxu0 0
    %434 = vmatprep.subr.bf16.mxu0 0
    %435 = vmatpush1.bf16.msra.mxu0 0
    %436 = vmatprep.subr.bf16.mxu0 0
    %437 = vmatpush1.bf16.msra.mxu0 0
    %438 = vmatprep.subr.bf16.mxu0 0
    %439 = vmatpush1.bf16.msra.mxu0 0
    %440 = vmatprep.subr.bf16.mxu0 0
    %441 = vmatpush1.bf16.msra.mxu0 0
    %442 = vmatprep.mubr.bf16.mxu0 0
    %443 = vmatmul.mubr.bf16.gmra.mrb[0].mxu0 %v405
    %v444 = vpop.f32.mrb[0].mxu0
    %v445 = vadd.f32 0.0, %v444
    %v446 = vpop.f32.mrb[0].mxu0
    %v447 = vpop.f32.mrb[0].mxu0
    %v448 = vpop.f32.mrb[0].mxu0
    %449 = vdwg.mxu0
    %v450 = vpack.c.bf16 %v445, %v397
    %v451 = vld [vmem:[%s9] sm:$0xf]
    %v452 = vld [vmem:[%s9 + $0x4] sm:$0xf]
    %v453 = vld [vmem:[%s9 + $0x8] sm:$0xf]
    %v454 = vld [vmem:[%s9 + $0xc] sm:$0xf]
    %v455 = vld [vmem:[%s10] sm:$0x1]
    %v457 = vlaneseq
    %v458 = vshrl.u32 %v457, 7
    %v459 = vsub.s32 0, %v458
    %v460 = vrot.slane %v455, %v459
    %v466 = vunpack.c.l.b16 %v451
    %v467 = vunpack.c.l.b16 %v452
    %v468 = vunpack.c.l.b16 %v453
    %v469 = vunpack.c.l.b16 %v454
    %v470 = vpack.c.b16 %v467, %v466
    %v471 = vpack.c.b16 %v469, %v468
    %v475 = vsel %vm179, %v450, 0
    %477 = vmatprep.subr.bf16.mxu0 0
    %478 = vmatpush1.bf16.msra.mxu0 %v470
    %479 = vmatprep.subr.bf16.mxu0 0
    %480 = vmatpush1.bf16.msra.mxu0 %v471
    %481 = vmatprep.subr.bf16.mxu0 0
    %482 = vmatpush1.bf16.msra.mxu0 0
    %483 = vmatprep.subr.bf16.mxu0 0
    %484 = vmatpush1.bf16.msra.mxu0 0
    %485 = vmatprep.subr.bf16.mxu0 0
    %486 = vmatpush1.bf16.msra.mxu0 0
    %487 = vmatprep.subr.bf16.mxu0 0
    %488 = vmatpush1.bf16.msra.mxu0 0
    %489 = vmatprep.subr.bf16.mxu0 0
    %490 = vmatpush1.bf16.msra.mxu0 0
    %491 = vmatprep.subr.bf16.mxu0 0
    %492 = vmatpush1.bf16.msra.mxu0 0
    %493 = vmatprep.subr.bf16.mxu0 0
    %494 = vmatpush1.bf16.msra.mxu0 0
    %495 = vmatprep.subr.bf16.mxu0 0
    %496 = vmatpush1.bf16.msra.mxu0 0
    %497 = vmatprep.subr.bf16.mxu0 0
    %498 = vmatpush1.bf16.msra.mxu0 0
    %499 = vmatprep.subr.bf16.mxu0 0
    %500 = vmatpush1.bf16.msra.mxu0 0
    %501 = vmatprep.subr.bf16.mxu0 0
    %502 = vmatpush1.bf16.msra.mxu0 0
    %503 = vmatprep.subr.bf16.mxu0 0
    %504 = vmatpush1.bf16.msra.mxu0 0
    %505 = vmatprep.subr.bf16.mxu0 0
    %506 = vmatpush1.bf16.msra.mxu0 0
    %507 = vmatprep.subr.bf16.mxu0 0
    %508 = vmatpush1.bf16.msra.mxu0 0
    %509 = vmatprep.mubr.bf16.mxu0 0
    %510 = vmatmul.mubr.bf16.gmra.mrb[0].mxu0 %v475
    %v511 = vpop.f32.mrb[0].mxu0
    %v512 = vadd.f32 %v460, %v511
    %v513 = vpop.f32.mrb[0].mxu0
    %v514 = vpop.f32.mrb[0].mxu0
    %v515 = vadd.f32 %v460, %v514
    %v516 = vpop.f32.mrb[0].mxu0
    %517 = vdwg.mxu0
    %v518 = vadd.f32 %v116, %v512
    %v519 = vadd.f32 %v117, %v515
    %v520 = vld [vmem:[%s11] sm:$0x1]
    %v521 = vld [vmem:[%s12] sm:$0x1]
    %v522 = vsel %vm179, %v518, 0.0
    %523 = vadd.xlane.f32.xlu0 %v522
    %v524 = vpop.xlane.xlu0 %523
    %v525 = vsel %vm179, %v519, 0.0
    %526 = vadd.xlane.f32.xlu0 %v525
    %v527 = vpop.xlane.xlu0 %526
    %v528 = vrcp.pop 32.0
    %v529 = vmul.f32 %v524, %v528
    %v530 = vmul.f32 %v527, %v528
    %v531 = vsub.f32 %v518, %v529
    %v532 = vsub.f32 %v519, %v530
    %v533 = vmul.f32 %v531, %v531
    %v534 = vmul.f32 %v532, %v532
    %v535 = vsel %vm179, %v533, 0.0
    %536 = vadd.xlane.f32.xlu0 %v535
    %v537 = vpop.xlane.xlu0 %536
    %v538 = vsel %vm179, %v534, 0.0
    %539 = vadd.xlane.f32.xlu0 %v538
    %v540 = vpop.xlane.xlu0 %539
    %v541 = vmul.f32 %v537, %v528
    %v542 = vmul.f32 %v540, %v528
    %v543 = vadd.f32 %v541, 1e-05
    %v544 = vadd.f32 %v542, 1e-05
    %v545 = vrsqrt.pop %v543
    %v546 = vrsqrt.pop %v544
    %v547 = vmul.f32 %v531, %v545
    %v548 = vmul.f32 %v532, %v546
    %v550 = vlaneseq
    %v551 = vshrl.u32 %v550, 7
    %v552 = vsub.s32 0, %v551
    %v553 = vrot.slane %v520, %v552
    %v555 = vmul.f32 %v547, %v553
    %v556 = vmul.f32 %v548, %v553
    %v558 = vlaneseq
    %v559 = vshrl.u32 %v558, 7
    %v560 = vsub.s32 0, %v559
    %v561 = vrot.slane %v521, %v560
    %v563 = vadd.f32 %v555, %v561
    %v564 = vadd.f32 %v556, %v561
    %v565 = vpack.c.bf16 %v564, %v563
    %v566 = vld [vmem:[%s13] sm:$0xf]
    %v567 = vld [vmem:[%s13 + $0x4] sm:$0xf]
    %v568 = vld [vmem:[%s13 + $0x8] sm:$0xf]
    %v569 = vld [vmem:[%s13 + $0xc] sm:$0xf]
    %v570 = vld [vmem:[%s14] sm:$0x1]
    %v572 = vlaneseq
    %v573 = vshrl.u32 %v572, 7
    %v574 = vsub.s32 0, %v573
    %v575 = vrot.slane %v570, %v574
    %v581 = vunpack.c.l.b16 %v566
    %v582 = vunpack.c.l.b16 %v567
    %v583 = vunpack.c.l.b16 %v568
    %v584 = vunpack.c.l.b16 %v569
    %v585 = vpack.c.b16 %v582, %v581
    %v586 = vpack.c.b16 %v584, %v583
    %v590 = vsel %vm179, %v565, 0
    %592 = vmatprep.subr.bf16.mxu0 0
    %593 = vmatpush1.bf16.msra.mxu0 %v585
    %594 = vmatprep.subr.bf16.mxu0 0
    %595 = vmatpush1.bf16.msra.mxu0 %v586
    %596 = vmatprep.subr.bf16.mxu0 0
    %597 = vmatpush1.bf16.msra.mxu0 0
    %598 = vmatprep.subr.bf16.mxu0 0
    %599 = vmatpush1.bf16.msra.mxu0 0
    %600 = vmatprep.subr.bf16.mxu0 0
    %601 = vmatpush1.bf16.msra.mxu0 0
    %602 = vmatprep.subr.bf16.mxu0 0
    %603 = vmatpush1.bf16.msra.mxu0 0
    %604 = vmatprep.subr.bf16.mxu0 0
    %605 = vmatpush1.bf16.msra.mxu0 0
    %606 = vmatprep.subr.bf16.mxu0 0
    %607 = vmatpush1.bf16.msra.mxu0 0
    %608 = vmatprep.subr.bf16.mxu0 0
    %609 = vmatpush1.bf16.msra.mxu0 0
    %610 = vmatprep.subr.bf16.mxu0 0
    %611 = vmatpush1.bf16.msra.mxu0 0
    %612 = vmatprep.subr.bf16.mxu0 0
    %613 = vmatpush1.bf16.msra.mxu0 0
    %614 = vmatprep.subr.bf16.mxu0 0
    %615 = vmatpush1.bf16.msra.mxu0 0
    %616 = vmatprep.subr.bf16.mxu0 0
    %617 = vmatpush1.bf16.msra.mxu0 0
    %618 = vmatprep.subr.bf16.mxu0 0
    %619 = vmatpush1.bf16.msra.mxu0 0
    %620 = vmatprep.subr.bf16.mxu0 0
    %621 = vmatpush1.bf16.msra.mxu0 0
    %622 = vmatprep.subr.bf16.mxu0 0
    %623 = vmatpush1.bf16.msra.mxu0 0
    %624 = vmatprep.mubr.bf16.mxu0 0
    %625 = vmatmul.mubr.bf16.gmra.mrb[0].mxu0 %v590
    %v626 = vpop.f32.mrb[0].mxu0
    %v627 = vadd.f32 %v575, %v626
    %v628 = vpop.f32.mrb[0].mxu0
    %v629 = vpop.f32.mrb[0].mxu0
    %v630 = vadd.f32 %v575, %v629
    %v631 = vpop.f32.mrb[0].mxu0
    %632 = vdwg.mxu0
    %v633 = vmul.f32 %v627, %v627
    %v634 = vmul.f32 %v630, %v630
    %v635 = vmul.f32 %v627, %v633
    %v636 = vmul.f32 %v630, %v634
    %v637 = vmul.f32 %v635, 0.044715
    %v638 = vmul.f32 %v636, 0.044715
    %v639 = vadd.f32 %v627, %v637
    %v640 = vadd.f32 %v630, %v638
    %v641 = vmul.f32 %v639, 0.7978846
    %v642 = vmul.f32 %v640, 0.7978846
    %v643 = vtanh.pop %v641
    %v644 = vtanh.pop %v642
    %v645 = vadd.f32 %v643, 1.0
    %v646 = vadd.f32 %v644, 1.0
    %v647 = vmul.f32 %v645, 0.5
    %v648 = vmul.f32 %v646, 0.5
    %v649 = vmul.f32 %v627, %v647
    %v650 = vmul.f32 %v630, %v648
    %v651 = vpack.c.bf16 %v650, %v649
    %v652 = vld [vmem:[%s15] sm:$0xf]
    %v653 = vld [vmem:[%s15 + $0x4] sm:$0xf]
    %v654 = vld [vmem:[%s15 + $0x8] sm:$0xf]
    %v655 = vld [vmem:[%s15 + $0xc] sm:$0xf]
    %v656 = vld [vmem:[%s15 + $0x10] sm:$0xf]
    %v657 = vld [vmem:[%s15 + $0x14] sm:$0xf]
    %v658 = vld [vmem:[%s15 + $0x18] sm:$0xf]
    %v659 = vld [vmem:[%s15 + $0x1c] sm:$0xf]
    %v660 = vld [vmem:[%s16] sm:$0x1]
    %v662 = vlaneseq
    %v663 = vshrl.u32 %v662, 7
    %v664 = vsub.s32 0, %v663
    %v665 = vrot.slane %v660, %v664
    %v675 = vunpack.c.l.b16 %v652
    %v676 = vunpack.c.l.b16 %v653
    %v677 = vunpack.c.l.b16 %v654
    %v678 = vunpack.c.l.b16 %v655
    %v679 = vunpack.c.l.b16 %v656
    %v680 = vunpack.c.l.b16 %v657
    %v681 = vunpack.c.l.b16 %v658
    %v682 = vunpack.c.l.b16 %v659
    %v683 = vpack.c.b16 %v676, %v675
    %v684 = vpack.c.b16 %v678, %v677
    %v685 = vpack.c.b16 %v680, %v679
    %v686 = vpack.c.b16 %v682, %v681
    %vm691 = vcmask 523264
    %v693 = vsel %vm691, %v651, 0
    %695 = vmatprep.subr.bf16.mxu0 0
    %696 = vmatpush1.bf16.msra.mxu0 %v683
    %697 = vmatprep.subr.bf16.mxu0 0
    %698 = vmatpush1.bf16.msra.mxu0 %v684
    %699 = vmatprep.subr.bf16.mxu0 0
    %700 = vmatpush1.bf16.msra.mxu0 %v685
    %701 = vmatprep.subr.bf16.mxu0 0
    %702 = vmatpush1.bf16.msra.mxu0 %v686
    %703 = vmatprep.subr.bf16.mxu0 0
    %704 = vmatpush1.bf16.msra.mxu0 0
    %705 = vmatprep.subr.bf16.mxu0 0
    %706 = vmatpush1.bf16.msra.mxu0 0
    %707 = vmatprep.subr.bf16.mxu0 0
    %708 = vmatpush1.bf16.msra.mxu0 0
    %709 = vmatprep.subr.bf16.mxu0 0
    %710 = vmatpush1.bf16.msra.mxu0 0
    %711 = vmatprep.subr.bf16.mxu0 0
    %712 = vmatpush1.bf16.msra.mxu0 0
    %713 = vmatprep.subr.bf16.mxu0 0
    %714 = vmatpush1.bf16.msra.mxu0 0
    %715 = vmatprep.subr.bf16.mxu0 0
    %716 = vmatpush1.bf16.msra.mxu0 0
    %717 = vmatprep.subr.bf16.mxu0 0
    %718 = vmatpush1.bf16.msra.mxu0 0
    %719 = vmatprep.subr.bf16.mxu0 0
    %720 = vmatpush1.bf16.msra.mxu0 0
    %721 = vmatprep.subr.bf16.mxu0 0
    %722 = vmatpush1.bf16.msra.mxu0 0
    %723 = vmatprep.subr.bf16.mxu0 0
    %724 = vmatpush1.bf16.msra.mxu0 0
    %725 = vmatprep.subr.bf16.mxu0 0
    %726 = vmatpush1.bf16.msra.mxu0 0
    %727 = vmatprep.mubr.bf16.mxu0 0
    %728 = vmatmul.mubr.bf16.gmra.mrb[0].mxu0 %v693
    %v729 = vpop.f32.mrb[0].mxu0
    %v730 = vadd.f32 %v665, %v729
    %v731 = vpop.f32.mrb[0].mxu0
    %v732 = vpop.f32.mrb[0].mxu0
    %v733 = vadd.f32 %v665, %v732
    %v734 = vpop.f32.mrb[0].mxu0
    %735 = vdwg.mxu0
    %v736 = vadd.f32 %v563, %v730
    %v737 = vadd.f32 %v564, %v733
    %v738 = vld [vmem:[%s17] sm:$0x1]
    %v739 = vld [vmem:[%s18] sm:$0x1]
    %v740 = vsel %vm179, %v736, 0.0
    %741 = vadd.xlane.f32.xlu0 %v740
    %v742 = vpop.xlane.xlu0 %741
    %v743 = vsel %vm179, %v737, 0.0
    %744 = vadd.xlane.f32.xlu0 %v743
    %v745 = vpop.xlane.xlu0 %744
    %v746 = vmul.f32 %v742, %v528
    %v747 = vmul.f32 %v745, %v528
    %v748 = vsub.f32 %v736, %v746
    %v749 = vsub.f32 %v737, %v747
    %v750 = vmul.f32 %v748, %v748
    %v751 = vmul.f32 %v749, %v749
    %v752 = vsel %vm179, %v750, 0.0
    %753 = vadd.xlane.f32.xlu0 %v752
    %v754 = vpop.xlane.xlu0 %753
    %v755 = vsel %vm179, %v751, 0.0
    %756 = vadd.xlane.f32.xlu0 %v755
    %v757 = vpop.xlane.xlu0 %756
    %v758 = vmul.f32 %v754, %v528
    %v759 = vmul.f32 %v757, %v528
    %v760 = vadd.f32 %v758, 1e-05
    %v761 = vadd.f32 %v759, 1e-05
    %v762 = vrsqrt.pop %v760
    %v763 = vrsqrt.pop %v761
    %v764 = vmul.f32 %v748, %v762
    %v765 = vmul.f32 %v749, %v763
    %v767 = vlaneseq
    %v768 = vshrl.u32 %v767, 7
    %v769 = vsub.s32 0, %v768
    %v770 = vrot.slane %v738, %v769
    %v772 = vmul.f32 %v764, %v770
    %v773 = vmul.f32 %v765, %v770
    %v775 = vlaneseq
    %v776 = vshrl.u32 %v775, 7
    %v777 = vsub.s32 0, %v776
    %v778 = vrot.slane %v739, %v777
    %v780 = vadd.f32 %v772, %v778
    %v781 = vadd.f32 %v773, %v778
    %v782 = vpack.c.bf16 %v781, %v780
    %s783 = scalar_lea.vmem %s7, 16
    %v784 = vld [vmem:[%s783] sm:$0xf]
    %v785 = vld [vmem:[%s783 + $0x4] sm:$0xf]
    %v786 = vld [vmem:[%s783 + $0x8] sm:$0xf]
    %v787 = vld [vmem:[%s783 + $0xc] sm:$0xf]
    %s788 = scalar_lea.vmem %s8, 1
    %v789 = vld [vmem:[%s788] sm:$0x1]
    %v791 = vlaneseq
    %v792 = vshrl.u32 %v791, 7
    %v793 = vsub.s32 0, %v792
    %v794 = vrot.slane %v789, %v793
    %v800 = vunpack.c.l.b16 %v784
    %v801 = vunpack.c.l.b16 %v785
    %v802 = vunpack.c.l.b16 %v786
    %v803 = vunpack.c.l.b16 %v787
    %v804 = vpack.c.b16 %v801, %v800
    %v805 = vpack.c.b16 %v803, %v802
    %v809 = vsel %vm179, %v782, 0
    %811 = vmatprep.subr.bf16.mxu0 0
    %812 = vmatpush1.bf16.msra.mxu0 %v804
    %813 = vmatprep.subr.bf16.mxu0 0
    %814 = vmatpush1.bf16.msra.mxu0 %v805
    %815 = vmatprep.subr.bf16.mxu0 0
    %816 = vmatpush1.bf16.msra.mxu0 0
    %817 = vmatprep.subr.bf16.mxu0 0
    %818 = vmatpush1.bf16.msra.mxu0 0
    %819 = vmatprep.subr.bf16.mxu0 0
    %820 = vmatpush1.bf16.msra.mxu0 0
    %821 = vmatprep.subr.bf16.mxu0 0
    %822 = vmatpush1.bf16.msra.mxu0 0
    %823 = vmatprep.subr.bf16.mxu0 0
    %824 = vmatpush1.bf16.msra.mxu0 0
    %825 = vmatprep.subr.bf16.mxu0 0
    %826 = vmatpush1.bf16.msra.mxu0 0
    %827 = vmatprep.subr.bf16.mxu0 0
    %828 = vmatpush1.bf16.msra.mxu0 0
    %829 = vmatprep.subr.bf16.mxu0 0
    %830 = vmatpush1.bf16.msra.mxu0 0
    %831 = vmatprep.subr.bf16.mxu0 0
    %832 = vmatpush1.bf16.msra.mxu0 0
    %833 = vmatprep.subr.bf16.mxu0 0
    %834 = vmatpush1.bf16.msra.mxu0 0
    %835 = vmatprep.subr.bf16.mxu0 0
    %836 = vmatpush1.bf16.msra.mxu0 0
    %837 = vmatprep.subr.bf16.mxu0 0
    %838 = vmatpush1.bf16.msra.mxu0 0
    %839 = vmatprep.subr.bf16.mxu0 0
    %840 = vmatpush1.bf16.msra.mxu0 0
    %841 = vmatprep.subr.bf16.mxu0 0
    %842 = vmatpush1.bf16.msra.mxu0 0
    %843 = vmatprep.mubr.bf16.mxu0 0
    %844 = vmatmul.mubr.bf16.gmra.mrb[0].mxu0 %v809
    %v845 = vpop.f32.mrb[0].mxu0
    %v846 = vadd.f32 %v794, %v845
    %v847 = vpop.f32.mrb[0].mxu0
    %v848 = vpop.f32.mrb[0].mxu0
    %v849 = vadd.f32 %v794, %v848
    %v850 = vpop.f32.mrb[0].mxu0
    %851 = vdwg.mxu0
    %v852 = vpack.c.bf16 %v846, %v846
    %v853 = vpack.c.bf16 %v849, %v849
    %855 = vrot.lane.b32.xlu0 %v852, 96
    %v856 = vpop.permute.xlu0 %855
    %v858 = vsel %vm179, %v852, 0
    %v861 = vsel %vm179, %v856, 0
    %863 = vmatprep.subr.bf16.mxu0 0
    %864 = vmatpush1.bf16.xpose.msra.mxu0 %v861
    %865 = vmatprep.subr.bf16.mxu0 0
    %866 = vmatpush1.bf16.xpose.msra.mxu0 0
    %867 = vmatprep.subr.bf16.mxu0 0
    %868 = vmatpush1.bf16.xpose.msra.mxu0 0
    %869 = vmatprep.subr.bf16.mxu0 0
    %870 = vmatpush1.bf16.xpose.msra.mxu0 0
    %871 = vmatprep.subr.bf16.mxu0 0
    %872 = vmatpush1.bf16.xpose.msra.mxu0 0
    %873 = vmatprep.subr.bf16.mxu0 0
    %874 = vmatpush1.bf16.xpose.msra.mxu0 0
    %875 = vmatprep.subr.bf16.mxu0 0
    %876 = vmatpush1.bf16.xpose.msra.mxu0 0
    %877 = vmatprep.subr.bf16.mxu0 0
    %878 = vmatpush1.bf16.xpose.msra.mxu0 0
    %879 = vmatprep.subr.bf16.mxu0 0
    %880 = vmatpush1.bf16.xpose.msra.mxu0 0
    %881 = vmatprep.subr.bf16.mxu0 0
    %882 = vmatpush1.bf16.xpose.msra.mxu0 0
    %883 = vmatprep.subr.bf16.mxu0 0
    %884 = vmatpush1.bf16.xpose.msra.mxu0 0
    %885 = vmatprep.subr.bf16.mxu0 0
    %886 = vmatpush1.bf16.xpose.msra.mxu0 0
    %887 = vmatprep.subr.bf16.mxu0 0
    %888 = vmatpush1.bf16.xpose.msra.mxu0 0
    %889 = vmatprep.subr.bf16.mxu0 0
    %890 = vmatpush1.bf16.xpose.msra.mxu0 0
    %891 = vmatprep.subr.bf16.mxu0 0
    %892 = vmatpush1.bf16.xpose.msra.mxu0 0
    %893 = vmatprep.subr.bf16.mxu0 0
    %894 = vmatpush1.bf16.xpose.msra.mxu0 0
    %895 = vmatprep.mubr.bf16.mxu0 0
    %896 = vmatmul.mubr.bf16.gmra.mrb[0].mxu0 %v858
    %v897 = vpop.f32.mrb[0].mxu0
    %v898 = vadd.f32 0.0, %v897
    %v899 = vpop.f32.mrb[0].mxu0
    %v900 = vpop.f32.mrb[0].mxu0
    %v901 = vpop.f32.mrb[0].mxu0
    %902 = vdwg.mxu0
    %904 = vrot.lane.b32.xlu0 %v853, 96
    %v905 = vpop.permute.xlu0 %904
    %v907 = vsel %vm179, %v853, 0
    %v910 = vsel %vm179, %v905, 0
    %912 = vmatprep.subr.bf16.mxu0 0
    %913 = vmatpush1.bf16.xpose.msra.mxu0 %v910
    %914 = vmatprep.subr.bf16.mxu0 0
    %915 = vmatpush1.bf16.xpose.msra.mxu0 0
    %916 = vmatprep.subr.bf16.mxu0 0
    %917 = vmatpush1.bf16.xpose.msra.mxu0 0
    %918 = vmatprep.subr.bf16.mxu0 0
    %919 = vmatpush1.bf16.xpose.msra.mxu0 0
    %920 = vmatprep.subr.bf16.mxu0 0
    %921 = vmatpush1.bf16.xpose.msra.mxu0 0
    %922 = vmatprep.subr.bf16.mxu0 0
    %923 = vmatpush1.bf16.xpose.msra.mxu0 0
    %924 = vmatprep.subr.bf16.mxu0 0
    %925 = vmatpush1.bf16.xpose.msra.mxu0 0
    %926 = vmatprep.subr.bf16.mxu0 0
    %927 = vmatpush1.bf16.xpose.msra.mxu0 0
    %928 = vmatprep.subr.bf16.mxu0 0
    %929 = vmatpush1.bf16.xpose.msra.mxu0 0
    %930 = vmatprep.subr.bf16.mxu0 0
    %931 = vmatpush1.bf16.xpose.msra.mxu0 0
    %932 = vmatprep.subr.bf16.mxu0 0
    %933 = vmatpush1.bf16.xpose.msra.mxu0 0
    %934 = vmatprep.subr.bf16.mxu0 0
    %935 = vmatpush1.bf16.xpose.msra.mxu0 0
    %936 = vmatprep.subr.bf16.mxu0 0
    %937 = vmatpush1.bf16.xpose.msra.mxu0 0
    %938 = vmatprep.subr.bf16.mxu0 0
    %939 = vmatpush1.bf16.xpose.msra.mxu0 0
    %940 = vmatprep.subr.bf16.mxu0 0
    %941 = vmatpush1.bf16.xpose.msra.mxu0 0
    %942 = vmatprep.subr.bf16.mxu0 0
    %943 = vmatpush1.bf16.xpose.msra.mxu0 0
    %944 = vmatprep.mubr.bf16.mxu0 0
    %945 = vmatmul.mubr.bf16.gmra.mrb[0].mxu0 %v907
    %v946 = vpop.f32.mrb[0].mxu0
    %v947 = vadd.f32 0.0, %v946
    %v948 = vpop.f32.mrb[0].mxu0
    %v949 = vpop.f32.mrb[0].mxu0
    %v950 = vpop.f32.mrb[0].mxu0
    %951 = vdwg.mxu0
    %v952 = vmul.f32 %v898, 0.17677669
    %v953 = vmul.f32 %v947, 0.17677669
    %v954 = vadd.f32 %v952, %v148
    %v955 = vadd.f32 %v953, %v152
    %v956 = vsel %vm328, %v954, -inf
    %957 = vmax.xlane.f32.xlu0 %v956
    %v958 = vpop.xlane.xlu0 %957
    %v959 = vsel %vm328, %v955, -inf
    %960 = vmax.xlane.f32.xlu0 %v959
    %v961 = vpop.xlane.xlu0 %960
    %v962 = vsub.f32 %v954, %v958
    %v963 = vsub.f32 %v955, %v961
    %v964 = vmul.f32 %v962, 1.442695
    %v965 = vpow.pop %v964
    %v966 = vmul.f32 %v963, 1.442695
    %v967 = vpow.pop %v966
    %v968 = vsel %vm328, %v965, 0.0
    %969 = vadd.xlane.f32.xlu0 %v968
    %v970 = vpop.xlane.xlu0 %969
    %v971 = vsel %vm328, %v967, 0.0
    %972 = vadd.xlane.f32.xlu0 %v971
    %v973 = vpop.xlane.xlu0 %972
    %v974 = vrcp.pop %v970
    %v975 = vmul.f32 %v965, %v974
    %v976 = vrcp.pop %v973
    %v977 = vmul.f32 %v967, %v976
    %v978 = vpack.c.bf16 %v975, %v975
    %v979 = vpack.c.bf16 %v977, %v977
    %980 = vrot.lane.b32.xlu0 %v852, 64
    %v981 = vpop.permute.xlu0 %980
    %v983 = vsel %vm328, %v978, 0
    %v986 = vsel %vm358, %v981, 0
    %988 = vmatprep.subr.bf16.mxu0 0
    %989 = vmatpush1.bf16.msra.mxu0 %v986
    %990 = vmatprep.subr.bf16.mxu0 0
    %991 = vmatpush1.bf16.msra.mxu0 0
    %992 = vmatprep.subr.bf16.mxu0 0
    %993 = vmatpush1.bf16.msra.mxu0 0
    %994 = vmatprep.subr.bf16.mxu0 0
    %995 = vmatpush1.bf16.msra.mxu0 0
    %996 = vmatprep.subr.bf16.mxu0 0
    %997 = vmatpush1.bf16.msra.mxu0 0
    %998 = vmatprep.subr.bf16.mxu0 0
    %999 = vmatpush1.bf16.msra.mxu0 0
    %1000 = vmatprep.subr.bf16.mxu0 0
    %1001 = vmatpush1.bf16.msra.mxu0 0
    %1002 = vmatprep.subr.bf16.mxu0 0
    %1003 = vmatpush1.bf16.msra.mxu0 0
    %1004 = vmatprep.subr.bf16.mxu0 0
    %1005 = vmatpush1.bf16.msra.mxu0 0
    %1006 = vmatprep.subr.bf16.mxu0 0
    %1007 = vmatpush1.bf16.msra.mxu0 0
    %1008 = vmatprep.subr.bf16.mxu0 0
    %1009 = vmatpush1.bf16.msra.mxu0 0
    %1010 = vmatprep.subr.bf16.mxu0 0
    %1011 = vmatpush1.bf16.msra.mxu0 0
    %1012 = vmatprep.subr.bf16.mxu0 0
    %1013 = vmatpush1.bf16.msra.mxu0 0
    %1014 = vmatprep.subr.bf16.mxu0 0
    %1015 = vmatpush1.bf16.msra.mxu0 0
    %1016 = vmatprep.subr.bf16.mxu0 0
    %1017 = vmatpush1.bf16.msra.mxu0 0
    %1018 = vmatprep.subr.bf16.mxu0 0
    %1019 = vmatpush1.bf16.msra.mxu0 0
    %1020 = vmatprep.mubr.bf16.mxu0 0
    %1021 = vmatmul.mubr.bf16.gmra.mrb[0].mxu0 %v983
    %v1022 = vpop.f32.mrb[0].mxu0
    %v1023 = vadd.f32 0.0, %v1022
    %v1024 = vpop.f32.mrb[0].mxu0
    %v1025 = vpop.f32.mrb[0].mxu0
    %v1026 = vpop.f32.mrb[0].mxu0
    %1027 = vdwg.mxu0
    %1028 = vrot.lane.b32.xlu0 %v853, 64
    %v1029 = vpop.permute.xlu0 %1028
    %v1031 = vsel %vm328, %v979, 0
    %v1034 = vsel %vm358, %v1029, 0
    %1036 = vmatprep.subr.bf16.mxu0 0
    %1037 = vmatpush1.bf16.msra.mxu0 %v1034
    %1038 = vmatprep.subr.bf16.mxu0 0
    %1039 = vmatpush1.bf16.msra.mxu0 0
    %1040 = vmatprep.subr.bf16.mxu0 0
    %1041 = vmatpush1.bf16.msra.mxu0 0
    %1042 = vmatprep.subr.bf16.mxu0 0
    %1043 = vmatpush1.bf16.msra.mxu0 0
    %1044 = vmatprep.subr.bf16.mxu0 0
    %1045 = vmatpush1.bf16.msra.mxu0 0
    %1046 = vmatprep.subr.bf16.mxu0 0
    %1047 = vmatpush1.bf16.msra.mxu0 0
    %1048 = vmatprep.subr.bf16.mxu0 0
    %1049 = vmatpush1.bf16.msra.mxu0 0
    %1050 = vmatprep.subr.bf16.mxu0 0
    %1051 = vmatpush1.bf16.msra.mxu0 0
    %1052 = vmatprep.subr.bf16.mxu0 0
    %1053 = vmatpush1.bf16.msra.mxu0 0
    %1054 = vmatprep.subr.bf16.mxu0 0
    %1055 = vmatpush1.bf16.msra.mxu0 0
    %1056 = vmatprep.subr.bf16.mxu0 0
    %1057 = vmatpush1.bf16.msra.mxu0 0
    %1058 = vmatprep.subr.bf16.mxu0 0
    %1059 = vmatpush1.bf16.msra.mxu0 0
    %1060 = vmatprep.subr.bf16.mxu0 0
    %1061 = vmatpush1.bf16.msra.mxu0 0
    %1062 = vmatprep.subr.bf16.mxu0 0
    %1063 = vmatpush1.bf16.msra.mxu0 0
    %1064 = vmatprep.subr.bf16.mxu0 0
    %1065 = vmatpush1.bf16.msra.mxu0 0
    %1066 = vmatprep.subr.bf16.mxu0 0
    %1067 = vmatpush1.bf16.msra.mxu0 0
    %1068 = vmatprep.mubr.bf16.mxu0 0
    %1069 = vmatmul.mubr.bf16.gmra.mrb[0].mxu0 %v1031
    %v1070 = vpop.f32.mrb[0].mxu0
    %v1071 = vadd.f32 0.0, %v1070
    %v1072 = vpop.f32.mrb[0].mxu0
    %v1073 = vpop.f32.mrb[0].mxu0
    %v1074 = vpop.f32.mrb[0].mxu0
    %1075 = vdwg.mxu0
    %v1076 = vpack.c.bf16 %v1071, %v1023
    %s1077 = scalar_lea.vmem %s9, 16
    %v1078 = vld [vmem:[%s1077] sm:$0xf]
    %v1079 = vld [vmem:[%s1077 + $0x4] sm:$0xf]
    %v1080 = vld [vmem:[%s1077 + $0x8] sm:$0xf]
    %v1081 = vld [vmem:[%s1077 + $0xc] sm:$0xf]
    %s1082 = scalar_lea.vmem %s10, 1
    %v1083 = vld [vmem:[%s1082] sm:$0x1]
    %v1085 = vlaneseq
    %v1086 = vshrl.u32 %v1085, 7
    %v1087 = vsub.s32 0, %v1086
    %v1088 = vrot.slane %v1083, %v1087
    %v1094 = vunpack.c.l.b16 %v1078
    %v1095 = vunpack.c.l.b16 %v1079
    %v1096 = vunpack.c.l.b16 %v1080
    %v1097 = vunpack.c.l.b16 %v1081
    %v1098 = vpack.c.b16 %v1095, %v1094
    %v1099 = vpack.c.b16 %v1097, %v1096
    %v1103 = vsel %vm179, %v1076, 0
    %1105 = vmatprep.subr.bf16.mxu0 0
    %1106 = vmatpush1.bf16.msra.mxu0 %v1098
    %1107 = vmatprep.subr.bf16.mxu0 0
    %1108 = vmatpush1.bf16.msra.mxu0 %v1099
    %1109 = vmatprep.subr.bf16.mxu0 0
    %1110 = vmatpush1.bf16.msra.mxu0 0
    %1111 = vmatprep.subr.bf16.mxu0 0
    %1112 = vmatpush1.bf16.msra.mxu0 0
    %1113 = vmatprep.subr.bf16.mxu0 0
    %1114 = vmatpush1.bf16.msra.mxu0 0
    %1115 = vmatprep.subr.bf16.mxu0 0
    %1116 = vmatpush1.bf16.msra.mxu0 0
    %1117 = vmatprep.subr.bf16.mxu0 0
    %1118 = vmatpush1.bf16.msra.mxu0 0
    %1119 = vmatprep.subr.bf16.mxu0 0
    %1120 = vmatpush1.bf16.msra.mxu0 0
    %1121 = vmatprep.subr.bf16.mxu0 0
    %1122 = vmatpush1.bf16.msra.mxu0 0
    %1123 = vmatprep.subr.bf16.mxu0 0
    %1124 = vmatpush1.bf16.msra.mxu0 0
    %1125 = vmatprep.subr.bf16.mxu0 0
    %1126 = vmatpush1.bf16.msra.mxu0 0
    %1127 = vmatprep.subr.bf16.mxu0 0
    %1128 = vmatpush1.bf16.msra.mxu0 0
    %1129 = vmatprep.subr.bf16.mxu0 0
    %1130 = vmatpush1.bf16.msra.mxu0 0
    %1131 = vmatprep.subr.bf16.mxu0 0
    %1132 = vmatpush1.bf16.msra.mxu0 0
    %1133 = vmatprep.subr.bf16.mxu0 0
    %1134 = vmatpush1.bf16.msra.mxu0 0
    %1135 = vmatprep.subr.bf16.mxu0 0
    %1136 = vmatpush1.bf16.msra.mxu0 0
    %1137 = vmatprep.mubr.bf16.mxu0 0
    %1138 = vmatmul.mubr.bf16.gmra.mrb[0].mxu0 %v1103
    %v1139 = vpop.f32.mrb[0].mxu0
    %v1140 = vadd.f32 %v1088, %v1139
    %v1141 = vpop.f32.mrb[0].mxu0
    %v1142 = vpop.f32.mrb[0].mxu0
    %v1143 = vadd.f32 %v1088, %v1142
    %v1144 = vpop.f32.mrb[0].mxu0
    %1145 = vdwg.mxu0
    %v1146 = vadd.f32 %v780, %v1140
    %v1147 = vadd.f32 %v781, %v1143
    %s1148 = scalar_lea.vmem %s11, 1
    %v1149 = vld [vmem:[%s1148] sm:$0x1]
    %s1150 = scalar_lea.vmem %s12, 1
    %v1151 = vld [vmem:[%s1150] sm:$0x1]
    %v1152 = vsel %vm179, %v1146, 0.0
    %1153 = vadd.xlane.f32.xlu0 %v1152
    %v1154 = vpop.xlane.xlu0 %1153
    %v1155 = vsel %vm179, %v1147, 0.0
    %1156 = vadd.xlane.f32.xlu0 %v1155
    %v1157 = vpop.xlane.xlu0 %1156
    %v1158 = vmul.f32 %v1154, %v528
    %v1159 = vmul.f32 %v1157, %v528
    %v1160 = vsub.f32 %v1146, %v1158
    %v1161 = vsub.f32 %v1147, %v1159
    %v1162 = vmul.f32 %v1160, %v1160
    %v1163 = vmul.f32 %v1161, %v1161
    %v1164 = vsel %vm179, %v1162, 0.0
    %1165 = vadd.xlane.f32.xlu0 %v1164
    %v1166 = vpop.xlane.xlu0 %1165
    %v1167 = vsel %vm179, %v1163, 0.0
    %1168 = vadd.xlane.f32.xlu0 %v1167
    %v1169 = vpop.xlane.xlu0 %1168
    %v1170 = vmul.f32 %v1166, %v528
    %v1171 = vmul.f32 %v1169, %v528
    %v1172 = vadd.f32 %v1170, 1e-05
    %v1173 = vadd.f32 %v1171, 1e-05
    %v1174 = vrsqrt.pop %v1172
    %v1175 = vrsqrt.pop %v1173
    %v1176 = vmul.f32 %v1160, %v1174
    %v1177 = vmul.f32 %v1161, %v1175
    %v1179 = vlaneseq
    %v1180 = vshrl.u32 %v1179, 7
    %v1181 = vsub.s32 0, %v1180
    %v1182 = vrot.slane %v1149, %v1181
    %v1184 = vmul.f32 %v1176, %v1182
    %v1185 = vmul.f32 %v1177, %v1182
    %v1187 = vlaneseq
    %v1188 = vshrl.u32 %v1187, 7
    %v1189 = vsub.s32 0, %v1188
    %v1190 = vrot.slane %v1151, %v1189
    %v1192 = vadd.f32 %v1184, %v1190
    %v1193 = vadd.f32 %v1185, %v1190
    %v1194 = vpack.c.bf16 %v1193, %v1192
    %s1195 = scalar_lea.vmem %s13, 16
    %v1196 = vld [vmem:[%s1195] sm:$0xf]
    %v1197 = vld [vmem:[%s1195 + $0x4] sm:$0xf]
    %v1198 = vld [vmem:[%s1195 + $0x8] sm:$0xf]
    %v1199 = vld [vmem:[%s1195 + $0xc] sm:$0xf]
    %s1200 = scalar_lea.vmem %s14, 1
    %v1201 = vld [vmem:[%s1200] sm:$0x1]
    %v1203 = vlaneseq
    %v1204 = vshrl.u32 %v1203, 7
    %v1205 = vsub.s32 0, %v1204
    %v1206 = vrot.slane %v1201, %v1205
    %v1212 = vunpack.c.l.b16 %v1196
    %v1213 = vunpack.c.l.b16 %v1197
    %v1214 = vunpack.c.l.b16 %v1198
    %v1215 = vunpack.c.l.b16 %v1199
    %v1216 = vpack.c.b16 %v1213, %v1212
    %v1217 = vpack.c.b16 %v1215, %v1214
    %v1221 = vsel %vm179, %v1194, 0
    %1223 = vmatprep.subr.bf16.mxu0 0
    %1224 = vmatpush1.bf16.msra.mxu0 %v1216
    %1225 = vmatprep.subr.bf16.mxu0 0
    %1226 = vmatpush1.bf16.msra.mxu0 %v1217
    %1227 = vmatprep.subr.bf16.mxu0 0
    %1228 = vmatpush1.bf16.msra.mxu0 0
    %1229 = vmatprep.subr.bf16.mxu0 0
    %1230 = vmatpush1.bf16.msra.mxu0 0
    %1231 = vmatprep.subr.bf16.mxu0 0
    %1232 = vmatpush1.bf16.msra.mxu0 0
    %1233 = vmatprep.subr.bf16.mxu0 0
    %1234 = vmatpush1.bf16.msra.mxu0 0
    %1235 = vmatprep.subr.bf16.mxu0 0
    %1236 = vmatpush1.bf16.msra.mxu0 0
    %1237 = vmatprep.subr.bf16.mxu0 0
    %1238 = vmatpush1.bf16.msra.mxu0 0
    %1239 = vmatprep.subr.bf16.mxu0 0
    %1240 = vmatpush1.bf16.msra.mxu0 0
    %1241 = vmatprep.subr.bf16.mxu0 0
    %1242 = vmatpush1.bf16.msra.mxu0 0
    %1243 = vmatprep.subr.bf16.mxu0 0
    %1244 = vmatpush1.bf16.msra.mxu0 0
    %1245 = vmatprep.subr.bf16.mxu0 0
    %1246 = vmatpush1.bf16.msra.mxu0 0
    %1247 = vmatprep.subr.bf16.mxu0 0
    %1248 = vmatpush1.bf16.msra.mxu0 0
    %1249 = vmatprep.subr.bf16.mxu0 0
    %1250 = vmatpush1.bf16.msra.mxu0 0
    %1251 = vmatprep.subr.bf16.mxu0 0
    %1252 = vmatpush1.bf16.msra.mxu0 0
    %1253 = vmatprep.subr.bf16.mxu0 0
    %1254 = vmatpush1.bf16.msra.mxu0 0
    %1255 = vmatprep.mubr.bf16.mxu0 0
    %1256 = vmatmul.mubr.bf16.gmra.mrb[0].mxu0 %v1221
    %v1257 = vpop.f32.mrb[0].mxu0
    %v1258 = vadd.f32 %v1206, %v1257
    %v1259 = vpop.f32.mrb[0].mxu0
    %v1260 = vpop.f32.mrb[0].mxu0
    %v1261 = vadd.f32 %v1206, %v1260
    %v1262 = vpop.f32.mrb[0].mxu0
    %1263 = vdwg.mxu0
    %v1264 = vmul.f32 %v1258, %v1258
    %v1265 = vmul.f32 %v1261, %v1261
    %v1266 = vmul.f32 %v1258, %v1264
    %v1267 = vmul.f32 %v1261, %v1265
    %v1268 = vmul.f32 %v1266, 0.044715
    %v1269 = vmul.f32 %v1267, 0.044715
    %v1270 = vadd.f32 %v1258, %v1268
    %v1271 = vadd.f32 %v1261, %v1269
    %v1272 = vmul.f32 %v1270, 0.7978846
    %v1273 = vmul.f32 %v1271, 0.7978846
    %v1274 = vtanh.pop %v1272
    %v1275 = vtanh.pop %v1273
    %v1276 = vadd.f32 %v1274, 1.0
    %v1277 = vadd.f32 %v1275, 1.0
    %v1278 = vmul.f32 %v1276, 0.5
    %v1279 = vmul.f32 %v1277, 0.5
    %v1280 = vmul.f32 %v1258, %v1278
    %v1281 = vmul.f32 %v1261, %v1279
    %v1282 = vpack.c.bf16 %v1281, %v1280
    %s1283 = scalar_lea.vmem %s15, 32
    %v1284 = vld [vmem:[%s1283] sm:$0xf]
    %v1285 = vld [vmem:[%s1283 + $0x4] sm:$0xf]
    %v1286 = vld [vmem:[%s1283 + $0x8] sm:$0xf]
    %v1287 = vld [vmem:[%s1283 + $0xc] sm:$0xf]
    %v1288 = vld [vmem:[%s1283 + $0x10] sm:$0xf]
    %v1289 = vld [vmem:[%s1283 + $0x14] sm:$0xf]
    %v1290 = vld [vmem:[%s1283 + $0x18] sm:$0xf]
    %v1291 = vld [vmem:[%s1283 + $0x1c] sm:$0xf]
    %s1292 = scalar_lea.vmem %s16, 1
    %v1293 = vld [vmem:[%s1292] sm:$0x1]
    %v1295 = vlaneseq
    %v1296 = vshrl.u32 %v1295, 7
    %v1297 = vsub.s32 0, %v1296
    %v1298 = vrot.slane %v1293, %v1297
    %v1308 = vunpack.c.l.b16 %v1284
    %v1309 = vunpack.c.l.b16 %v1285
    %v1310 = vunpack.c.l.b16 %v1286
    %v1311 = vunpack.c.l.b16 %v1287
    %v1312 = vunpack.c.l.b16 %v1288
    %v1313 = vunpack.c.l.b16 %v1289
    %v1314 = vunpack.c.l.b16 %v1290
    %v1315 = vunpack.c.l.b16 %v1291
    %v1316 = vpack.c.b16 %v1309, %v1308
    %v1317 = vpack.c.b16 %v1311, %v1310
    %v1318 = vpack.c.b16 %v1313, %v1312
    %v1319 = vpack.c.b16 %v1315, %v1314
    %v1325 = vsel %vm691, %v1282, 0
    %1327 = vmatprep.subr.bf16.mxu0 0
    %1328 = vmatpush1.bf16.msra.mxu0 %v1316
    %1329 = vmatprep.subr.bf16.mxu0 0
    %1330 = vmatpush1.bf16.msra.mxu0 %v1317
    %1331 = vmatprep.subr.bf16.mxu0 0
    %1332 = vmatpush1.bf16.msra.mxu0 %v1318
    %1333 = vmatprep.subr.bf16.mxu0 0
    %1334 = vmatpush1.bf16.msra.mxu0 %v1319
    %1335 = vmatprep.subr.bf16.mxu0 0
    %1336 = vmatpush1.bf16.msra.mxu0 0
    %1337 = vmatprep.subr.bf16.mxu0 0
    %1338 = vmatpush1.bf16.msra.mxu0 0
    %1339 = vmatprep.subr.bf16.mxu0 0
    %1340 = vmatpush1.bf16.msra.mxu0 0
    %1341 = vmatprep.subr.bf16.mxu0 0
    %1342 = vmatpush1.bf16.msra.mxu0 0
    %1343 = vmatprep.subr.bf16.mxu0 0
    %1344 = vmatpush1.bf16.msra.mxu0 0
    %1345 = vmatprep.subr.bf16.mxu0 0
    %1346 = vmatpush1.bf16.msra.mxu0 0
    %1347 = vmatprep.subr.bf16.mxu0 0
    %1348 = vmatpush1.bf16.msra.mxu0 0
    %1349 = vmatprep.subr.bf16.mxu0 0
    %1350 = vmatpush1.bf16.msra.mxu0 0
    %1351 = vmatprep.subr.bf16.mxu0 0
    %1352 = vmatpush1.bf16.msra.mxu0 0
    %1353 = vmatprep.subr.bf16.mxu0 0
    %1354 = vmatpush1.bf16.msra.mxu0 0
    %1355 = vmatprep.subr.bf16.mxu0 0
    %1356 = vmatpush1.bf16.msra.mxu0 0
    %1357 = vmatprep.subr.bf16.mxu0 0
    %1358 = vmatpush1.bf16.msra.mxu0 0
    %1359 = vmatprep.mubr.bf16.mxu0 0
    %1360 = vmatmul.mubr.bf16.gmra.mrb[0].mxu0 %v1325
    %v1361 = vpop.f32.mrb[0].mxu0
    %v1362 = vadd.f32 %v1298, %v1361
    %v1363 = vpop.f32.mrb[0].mxu0
    %v1364 = vpop.f32.mrb[0].mxu0
    %v1365 = vadd.f32 %v1298, %v1364
    %v1366 = vpop.f32.mrb[0].mxu0
    %1367 = vdwg.mxu0
    %v1368 = vadd.f32 %v1192, %v1362
    %v1369 = vadd.f32 %v1193, %v1365
    %s1370 = scalar_lea.vmem %s17, 1
    %v1371 = vld [vmem:[%s1370] sm:$0x1]
    %s1372 = scalar_lea.vmem %s18, 1
    %v1373 = vld [vmem:[%s1372] sm:$0x1]
    %v1374 = vsel %vm179, %v1368, 0.0
    %1375 = vadd.xlane.f32.xlu0 %v1374
    %v1376 = vpop.xlane.xlu0 %1375
    %v1377 = vsel %vm179, %v1369, 0.0
    %1378 = vadd.xlane.f32.xlu0 %v1377
    %v1379 = vpop.xlane.xlu0 %1378
    %v1380 = vmul.f32 %v1376, %v528
    %v1381 = vmul.f32 %v1379, %v528
    %v1382 = vsub.f32 %v1368, %v1380
    %v1383 = vsub.f32 %v1369, %v1381
    %v1384 = vmul.f32 %v1382, %v1382
    %v1385 = vmul.f32 %v1383, %v1383
    %v1386 = vsel %vm179, %v1384, 0.0
    %1387 = vadd.xlane.f32.xlu0 %v1386
    %v1388 = vpop.xlane.xlu0 %1387
    %v1389 = vsel %vm179, %v1385, 0.0
    %1390 = vadd.xlane.f32.xlu0 %v1389
    %v1391 = vpop.xlane.xlu0 %1390
    %v1392 = vmul.f32 %v1388, %v528
    %v1393 = vmul.f32 %v1391, %v528
    %v1394 = vadd.f32 %v1392, 1e-05
    %v1395 = vadd.f32 %v1393, 1e-05
    %v1396 = vrsqrt.pop %v1394
    %v1397 = vrsqrt.pop %v1395
    %v1398 = vmul.f32 %v1382, %v1396
    %v1399 = vmul.f32 %v1383, %v1397
    %v1401 = vlaneseq
    %v1402 = vshrl.u32 %v1401, 7
    %v1403 = vsub.s32 0, %v1402
    %v1404 = vrot.slane %v1371, %v1403
    %v1406 = vmul.f32 %v1398, %v1404
    %v1407 = vmul.f32 %v1399, %v1404
    %v1409 = vlaneseq
    %v1410 = vshrl.u32 %v1409, 7
    %v1411 = vsub.s32 0, %v1410
    %v1412 = vrot.slane %v1373, %v1411
    %v1414 = vadd.f32 %v1406, %v1412
    %v1415 = vadd.f32 %v1407, %v1412
    %v1416 = vld [vmem:[%s19] sm:$0x1]
    %v1417 = vld [vmem:[%s19 + $0x1] sm:$0x1]
    %v1418 = vlaneseq
    %v1419 = vshrl.u32 %v1418, 7
    %v1420 = vsub.s32 0, %v1419
    %v1421 = vrot.slane %v1416, %v1420
    %v1422 = vmul.f32 %v1414, %v1421
    %v1423 = vmul.f32 %v1415, %v1421
    %v1424 = vsel %vm179, %v1422, 0.0
    %1425 = vadd.xlane.f32.xlu0 %v1424
    %v1426 = vpop.xlane.xlu0 %1425
    %v1427 = vsel %vm179, %v1423, 0.0
    %1428 = vadd.xlane.f32.xlu0 %v1427
    %v1429 = vpop.xlane.xlu0 %1428
    %s1430 = sld [smem:[#allocation3]]
    %v1431 = vstv %s1430
    %v1432 = vadd.f32 %v1426, %v1431
    %v1433 = vadd.f32 %v1429, %v1431
    %v1434 = vlaneseq
    %v1435 = vshrl.u32 %v1434, 7
    %v1436 = vsub.s32 0, %v1435
    %v1437 = vrot.slane %v1417, %v1436
    %v1438 = vmul.f32 %v1414, %v1437
    %v1439 = vmul.f32 %v1415, %v1437
    %v1440 = vsel %vm179, %v1438, 0.0
    %1441 = vadd.xlane.f32.xlu0 %v1440
    %v1442 = vpop.xlane.xlu0 %1441
    %v1443 = vsel %vm179, %v1439, 0.0
    %1444 = vadd.xlane.f32.xlu0 %v1443
    %v1445 = vpop.xlane.xlu0 %1444
    %s1446 = sld [smem:[#allocation3 + $0x1]]
    %v1447 = vstv %s1446
    %v1448 = vadd.f32 %v1442, %v1447
    %v1449 = vadd.f32 %v1445, %v1447
    %s1450 = sld [smem:[#allocation6]]
    %s1451 = sld [smem:[#allocation6 + $0x1]]
    %s1452 = sld [smem:[#allocation8]]
    %s1453 = sld [smem:[#allocation8 + $0x1]]
    %s1454 = sld [smem:[#allocation9]]
    %s1455 = sld [smem:[#allocation9 + $0x1]]
    %s1456 = sld [smem:[#allocation9 + $0x2]]
    %s1457 = sld [smem:[#allocation9 + $0x3]]
    %vm1458 = vcmask 58368
    %v1459 = vsel %vm1458, %v118, 0
    %v1460 = vand.u32 %v1459, 65535
    %v1461 = vshrl.u32 %v1459, 16
    %v1462 = vcvt.s32.f32 %v1460
    %v1463 = vcvt.s32.f32 %v1461
    %1464 = vadd.xlane.f32.xlu0 %v1462
    %v1465 = vpop.xlane.xlu0 %1464
    %1466 = vadd.xlane.f32.xlu0 %v1463
    %v1467 = vpop.xlane.xlu0 %1466
    %v1468 = vcvt.f32.s32 %v1465
    %v1469 = vcvt.f32.s32 %v1467
    %v1470 = vshll.u32 %v1469, 16
    %v1471 = vadd.s32 %v1470, %v1468
    %v1472 = vsub.s32 %v1471, 1
    %vm1473 = vcmp.gt.s32.totalorder %v1472, 0
    %v1474 = vsel %vm1473, %v1472, 0
    %v1475 = vstv %s1450
    %v1476 = vadd.f32 %v1475, %v1432
    %v1477 = vadd.f32 %v1475, %v1433
    %v1478 = vstv %s1451
    %v1479 = vadd.f32 %v1478, %v1448
    %v1480 = vadd.f32 %v1478, %v1449
    %vm1481 = vcmp.gt.f32.partialorder %v119, 0.5
    %v1482 = vstv %s1454
    %v1483 = vadd.f32 %v1476, %v1482
    %v1484 = vadd.f32 %v1477, %v1482
    %v1485 = vstv %s1456
    %v1486 = vadd.f32 %v1479, %v1485
    %v1487 = vadd.f32 %v1480, %v1485
    %v1488 = vstv %s1455
    %v1489 = vadd.f32 %v1476, %v1488
    %v1490 = vadd.f32 %v1477, %v1488
    %v1491 = vstv %s1457
    %v1492 = vadd.f32 %v1479, %v1491
    %v1493 = vadd.f32 %v1480, %v1491
    %v1494 = vmax.f32 %v1483, %v1486
    %v1495 = vmax.f32 %v1484, %v1487
    %v1498 = vrot.slane %v1432, 1
    %v1499 = vrot.slane %v1433, 1
    %v1502 = vadd.f32 %v1494, %v1498
    %v1503 = vadd.f32 %v1495, %v1499
    %v1504 = vmax.f32 %v1489, %v1492
    %v1505 = vmax.f32 %v1490, %v1493
    %v1508 = vrot.slane %v1448, 1
    %v1509 = vrot.slane %v1449, 1
    %v1512 = vadd.f32 %v1504, %v1508
    %v1513 = vadd.f32 %v1505, %v1509
    %vm1514 = vcmp.gt.f32.partialorder %v1486, %v1483
    %vm1515 = vcmp.gt.f32.partialorder %v1487, %v1484
    %v1516 = vsel %vm1514, 1, 0
    %v1517 = vsel %vm1515, 1, 0
    %vm1518 = vcmp.gt.f32.partialorder %v1492, %v1489
    %vm1519 = vcmp.gt.f32.partialorder %v1493, %v1490
    %v1520 = vsel %vm1518, 1, 0
    %v1521 = vsel %vm1519, 1, 0
    %v1524 = vrot.slane %v1503, 7
    %vm1525 = vcmask 1041409
    %v1526 = vsel %vm1525, %v1524, %v1502
    %1527 = vrot.lane.b32.xlu0 %v1526, 1
    %v1528 = vpop.permute.xlu0 %1527
    %v1532 = vrot.slane %v1477, 7
    %v1533 = vsel %vm1525, %v1532, %v1476
    %v1535 = vsel %vm1481, %v1528, %v1533
    %v1538 = vrot.slane %v1513, 7
    %v1539 = vsel %vm1525, %v1538, %v1512
    %1540 = vrot.lane.b32.xlu0 %v1539, 1
    %v1541 = vpop.permute.xlu0 %1540
    %v1545 = vrot.slane %v1480, 7
    %v1546 = vsel %vm1525, %v1545, %v1479
    %v1548 = vsel %vm1481, %v1541, %v1546
    %v1549 = vadd.f32 %v1535, %v1482
    %v1550 = vadd.f32 %v1548, %v1485
    %v1551 = vadd.f32 %v1535, %v1488
    %v1552 = vadd.f32 %v1548, %v1491
    %v1553 = vmax.f32 %v1549, %v1550
    %v1554 = vrot.slane %v1432, 2
    %v1555 = vsel %vm1525, %v1499, %v1554
    %v1557 = vadd.f32 %v1553, %v1555
    %v1558 = vmax.f32 %v1551, %v1552
    %v1559 = vrot.slane %v1448, 2
    %v1560 = vsel %vm1525, %v1509, %v1559
    %v1562 = vadd.f32 %v1558, %v1560
    %vm1563 = vcmp.gt.f32.partialorder %v1550, %v1549
    %v1564 = vsel %vm1563, 1, 0
    %vm1565 = vcmp.gt.f32.partialorder %v1552, %v1551
    %v1566 = vsel %vm1565, 1, 0
    %1568 = vrot.lane.b32.xlu0 %v1557, 1
    %v1569 = vpop.permute.xlu0 %1568
    %1572 = vrot.lane.b32.xlu0 %v1535, 1
    %v1573 = vpop.permute.xlu0 %1572
    %v1575 = vsel %vm1481, %v1569, %v1573
    %1577 = vrot.lane.b32.xlu0 %v1562, 1
    %v1578 = vpop.permute.xlu0 %1577
    %1581 = vrot.lane.b32.xlu0 %v1548, 1
    %v1582 = vpop.permute.xlu0 %1581
    %v1584 = vsel %vm1481, %v1578, %v1582
    %v1585 = vadd.f32 %v1575, %v1482
    %v1586 = vadd.f32 %v1584, %v1485
    %v1587 = vadd.f32 %v1575, %v1488
    %v1588 = vadd.f32 %v1584, %v1491
    %v1589 = vmax.f32 %v1585, %v1586
    %v1590 = vrot.slane %v1432, 3
    %v1591 = vrot.slane %v1433, 2
    %v1592 = vsel %vm1525, %v1591, %v1590
    %v1594 = vadd.f32 %v1589, %v1592
    %v1595 = vmax.f32 %v1587, %v1588
    %v1596 = vrot.slane %v1448, 3
    %v1597 = vrot.slane %v1449, 2
    %v1598 = vsel %vm1525, %v1597, %v1596
    %v1600 = vadd.f32 %v1595, %v1598
    %vm1601 = vcmp.gt.f32.partialorder %v1586, %v1585
    %v1602 = vsel %vm1601, 1, 0
    %vm1603 = vcmp.gt.f32.partialorder %v1588, %v1587
    %v1604 = vsel %vm1603, 1, 0
    %1606 = vrot.lane.b32.xlu0 %v1594, 1
    %v1607 = vpop.permute.xlu0 %1606
    %1610 = vrot.lane.b32.xlu0 %v1575, 1
    %v1611 = vpop.permute.xlu0 %1610
    %v1613 = vsel %vm1481, %v1607, %v1611
    %1615 = vrot.lane.b32.xlu0 %v1600, 1
    %v1616 = vpop.permute.xlu0 %1615
    %1619 = vrot.lane.b32.xlu0 %v1584, 1
    %v1620 = vpop.permute.xlu0 %1619
    %v1622 = vsel %vm1481, %v1616, %v1620
    %v1623 = vadd.f32 %v1613, %v1482
    %v1624 = vadd.f32 %v1622, %v1485
    %v1625 = vadd.f32 %v1613, %v1488
    %v1626 = vadd.f32 %v1622, %v1491
    %v1627 = vmax.f32 %v1623, %v1624
    %v1628 = vrot.slane %v1432, 4
    %v1629 = vrot.slane %v1433, 3
    %v1630 = vsel %vm1525, %v1629, %v1628
    %v1632 = vadd.f32 %v1627, %v1630
    %v1633 = vmax.f32 %v1625, %v1626
    %v1634 = vrot.slane %v1448, 4
    %v1635 = vrot.slane %v1449, 3
    %v1636 = vsel %vm1525, %v1635, %v1634
    %v1638 = vadd.f32 %v1633, %v1636
    %vm1639 = vcmp.gt.f32.partialorder %v1624, %v1623
    %v1640 = vsel %vm1639, 1, 0
    %vm1641 = vcmp.gt.f32.partialorder %v1626, %v1625
    %v1642 = vsel %vm1641, 1, 0
    %1644 = vrot.lane.b32.xlu0 %v1632, 1
    %v1645 = vpop.permute.xlu0 %1644
    %1648 = vrot.lane.b32.xlu0 %v1613, 1
    %v1649 = vpop.permute.xlu0 %1648
    %v1651 = vsel %vm1481, %v1645, %v1649
    %1653 = vrot.lane.b32.xlu0 %v1638, 1
    %v1654 = vpop.permute.xlu0 %1653
    %1657 = vrot.lane.b32.xlu0 %v1622, 1
    %v1658 = vpop.permute.xlu0 %1657
    %v1660 = vsel %vm1481, %v1654, %v1658
    %v1661 = vadd.f32 %v1651, %v1482
    %v1662 = vadd.f32 %v1660, %v1485
    %v1663 = vadd.f32 %v1651, %v1488
    %v1664 = vadd.f32 %v1660, %v1491
    %v1665 = vmax.f32 %v1661, %v1662
    %v1666 = vrot.slane %v1432, 5
    %v1667 = vrot.slane %v1433, 4
    %v1668 = vsel %vm1525, %v1667, %v1666
    %v1670 = vadd.f32 %v1665, %v1668
    %v1671 = vmax.f32 %v1663, %v1664
    %v1672 = vrot.slane %v1448, 5
    %v1673 = vrot.slane %v1449, 4
    %v1674 = vsel %vm1525, %v1673, %v1672
    %v1676 = vadd.f32 %v1671, %v1674
    %vm1677 = vcmp.gt.f32.partialorder %v1662, %v1661
    %v1678 = vsel %vm1677, 1, 0
    %vm1679 = vcmp.gt.f32.partialorder %v1664, %v1663
    %v1680 = vsel %vm1679, 1, 0
    %1682 = vrot.lane.b32.xlu0 %v1670, 1
    %v1683 = vpop.permute.xlu0 %1682
    %1686 = vrot.lane.b32.xlu0 %v1651, 1
    %v1687 = vpop.permute.xlu0 %1686
    %v1689 = vsel %vm1481, %v1683, %v1687
    %1691 = vrot.lane.b32.xlu0 %v1676, 1
    %v1692 = vpop.permute.xlu0 %1691
    %1695 = vrot.lane.b32.xlu0 %v1660, 1
    %v1696 = vpop.permute.xlu0 %1695
    %v1698 = vsel %vm1481, %v1692, %v1696
    %v1699 = vadd.f32 %v1689, %v1482
    %v1700 = vadd.f32 %v1698, %v1485
    %v1701 = vadd.f32 %v1689, %v1488
    %v1702 = vadd.f32 %v1698, %v1491
    %v1703 = vmax.f32 %v1699, %v1700
    %v1704 = vrot.slane %v1432, 6
    %v1705 = vrot.slane %v1433, 5
    %v1706 = vsel %vm1525, %v1705, %v1704
    %v1708 = vadd.f32 %v1703, %v1706
    %v1709 = vmax.f32 %v1701, %v1702
    %v1710 = vrot.slane %v1448, 6
    %v1711 = vrot.slane %v1449, 5
    %v1712 = vsel %vm1525, %v1711, %v1710
    %v1714 = vadd.f32 %v1709, %v1712
    %vm1715 = vcmp.gt.f32.partialorder %v1700, %v1699
    %v1716 = vsel %vm1715, 1, 0
    %vm1717 = vcmp.gt.f32.partialorder %v1702, %v1701
    %v1718 = vsel %vm1717, 1, 0
    %1720 = vrot.lane.b32.xlu0 %v1708, 1
    %v1721 = vpop.permute.xlu0 %1720
    %1724 = vrot.lane.b32.xlu0 %v1689, 1
    %v1725 = vpop.permute.xlu0 %1724
    %v1727 = vsel %vm1481, %v1721, %v1725
    %1729 = vrot.lane.b32.xlu0 %v1714, 1
    %v1730 = vpop.permute.xlu0 %1729
    %1733 = vrot.lane.b32.xlu0 %v1698, 1
    %v1734 = vpop.permute.xlu0 %1733
    %v1736 = vsel %vm1481, %v1730, %v1734
    %v1737 = vadd.f32 %v1727, %v1482
    %v1738 = vadd.f32 %v1736, %v1485
    %v1739 = vadd.f32 %v1727, %v1488
    %v1740 = vadd.f32 %v1736, %v1491
    %v1741 = vmax.f32 %v1737, %v1738
    %v1742 = vrot.slane %v1432, 7
    %v1743 = vrot.slane %v1433, 6
    %v1744 = vsel %vm1525, %v1743, %v1742
    %v1746 = vadd.f32 %v1741, %v1744
    %v1747 = vmax.f32 %v1739, %v1740
    %v1748 = vrot.slane %v1448, 7
    %v1749 = vrot.slane %v1449, 6
    %v1750 = vsel %vm1525, %v1749, %v1748
    %v1752 = vadd.f32 %v1747, %v1750
    %vm1753 = vcmp.gt.f32.partialorder %v1738, %v1737
    %v1754 = vsel %vm1753, 1, 0
    %vm1755 = vcmp.gt.f32.partialorder %v1740, %v1739
    %v1756 = vsel %vm1755, 1, 0
    %1758 = vrot.lane.b32.xlu0 %v1746, 1
    %v1759 = vpop.permute.xlu0 %1758
    %1762 = vrot.lane.b32.xlu0 %v1727, 1
    %v1763 = vpop.permute.xlu0 %1762
    %v1765 = vsel %vm1481, %v1759, %v1763
    %1767 = vrot.lane.b32.xlu0 %v1752, 1
    %v1768 = vpop.permute.xlu0 %1767
    %1771 = vrot.lane.b32.xlu0 %v1736, 1
    %v1772 = vpop.permute.xlu0 %1771
    %v1774 = vsel %vm1481, %v1768, %v1772
    %v1775 = vstv %s1453
    %v1776 = vadd.f32 %v1774, %v1775
    %v1777 = vstv %s1452
    %v1778 = vadd.f32 %v1765, %v1777
    %vm1779 = vcmp.gt.f32.partialorder %v1776, %v1778
    %v1780 = vsel %vm1779, 1, 0
    %v1781 = vlaneseq
    %v1782 = vand.u32 %v1781, 127
    %vm1783 = vcmp.eq.s32.totalorder %v1782, 7
    %v1784 = vsel %vm1783, 1, 0
    %1785 = vset.pattern.permute.xlu0 7
    %1786 = vperm.xlu0 %1785, %v1780
    %v1787 = vpop.permute.xlu0 %1786
    %v1788 = vmul.u32 %v1787, %v1784
    %vm1789 = vcmp.eq.s32.totalorder %v1780, 0
    %1790 = vrot.lane.b32.xlu0 %v1754, 1
    %v1791 = vpop.permute.xlu0 %1790
    %1792 = vrot.lane.b32.xlu0 %v1756, 1
    %v1793 = vpop.permute.xlu0 %1792
    %v1794 = vsel %vm1789, %v1791, %v1793
    %vm1795 = vcmp.le.s32.totalorder %v1474, 6
    %v1796 = vsel %vm1795, %v1780, %v1794
    %vm1797 = vcmp.eq.s32.totalorder %v1782, 6
    %v1798 = vsel %vm1797, 1, 0
    %1799 = vset.pattern.permute.xlu0 7
    %1800 = vperm.xlu0 %1799, %v1796
    %v1801 = vpop.permute.xlu0 %1800
    %v1802 = vmul.u32 %v1801, %v1798
    %v1803 = vadd.s32 %v1788, %v1802
    %vm1804 = vcmp.eq.s32.totalorder %v1796, 0
    %1805 = vrot.lane.b32.xlu0 %v1716, 2
    %v1806 = vpop.permute.xlu0 %1805
    %1807 = vrot.lane.b32.xlu0 %v1718, 2
    %v1808 = vpop.permute.xlu0 %1807
    %v1809 = vsel %vm1804, %v1806, %v1808
    %vm1810 = vcmp.le.s32.totalorder %v1474, 5
    %v1811 = vsel %vm1810, %v1780, %v1809
    %vm1812 = vcmp.eq.s32.totalorder %v1782, 5
    %v1813 = vsel %vm1812, 1, 0
    %1814 = vset.pattern.permute.xlu0 7
    %1815 = vperm.xlu0 %1814, %v1811
    %v1816 = vpop.permute.xlu0 %1815
    %v1817 = vmul.u32 %v1816, %v1813
    %v1818 = vadd.s32 %v1803, %v1817
    %vm1819 = vcmp.eq.s32.totalorder %v1811, 0
    %1820 = vrot.lane.b32.xlu0 %v1678, 3
    %v1821 = vpop.permute.xlu0 %1820
    %1822 = vrot.lane.b32.xlu0 %v1680, 3
    %v1823 = vpop.permute.xlu0 %1822
    %v1824 = vsel %vm1819, %v1821, %v1823
    %vm1825 = vcmp.le.s32.totalorder %v1474, 4
    %v1826 = vsel %vm1825, %v1780, %v1824
    %vm1827 = vcmp.eq.s32.totalorder %v1782, 4
    %v1828 = vsel %vm1827, 1, 0
    %1829 = vset.pattern.permute.xlu0 7
    %1830 = vperm.xlu0 %1829, %v1826
    %v1831 = vpop.permute.xlu0 %1830
    %v1832 = vmul.u32 %v1831, %v1828
    %v1833 = vadd.s32 %v1818, %v1832
    %vm1834 = vcmp.eq.s32.totalorder %v1826, 0
    %1835 = vrot.lane.b32.xlu0 %v1640, 4
    %v1836 = vpop.permute.xlu0 %1835
    %1837 = vrot.lane.b32.xlu0 %v1642, 4
    %v1838 = vpop.permute.xlu0 %1837
    %v1839 = vsel %vm1834, %v1836, %v1838
    %vm1840 = vcmp.le.s32.totalorder %v1474, 3
    %v1841 = vsel %vm1840, %v1780, %v1839
    %vm1842 = vcmp.eq.s32.totalorder %v1782, 3
    %v1843 = vsel %vm1842, 1, 0
    %1844 = vset.pattern.permute.xlu0 7
    %1845 = vperm.xlu0 %1844, %v1841
    %v1846 = vpop.permute.xlu0 %1845
    %v1847 = vmul.u32 %v1846, %v1843
    %v1848 = vadd.s32 %v1833, %v1847
    %vm1849 = vcmp.eq.s32.totalorder %v1841, 0
    %1850 = vrot.lane.b32.xlu0 %v1602, 5
    %v1851 = vpop.permute.xlu0 %1850
    %1852 = vrot.lane.b32.xlu0 %v1604, 5
    %v1853 = vpop.permute.xlu0 %1852
    %v1854 = vsel %vm1849, %v1851, %v1853
    %vm1855 = vcmp.le.s32.totalorder %v1474, 2
    %v1856 = vsel %vm1855, %v1780, %v1854
    %vm1857 = vcmp.eq.s32.totalorder %v1782, 2
    %v1858 = vsel %vm1857, 1, 0
    %1859 = vset.pattern.permute.xlu0 7
    %1860 = vperm.xlu0 %1859, %v1856
    %v1861 = vpop.permute.xlu0 %1860
    %v1862 = vmul.u32 %v1861, %v1858
    %v1863 = vadd.s32 %v1848, %v1862
    %vm1864 = vcmp.eq.s32.totalorder %v1856, 0
    %1865 = vrot.lane.b32.xlu0 %v1564, 6
    %v1866 = vpop.permute.xlu0 %1865
    %1867 = vrot.lane.b32.xlu0 %v1566, 6
    %v1868 = vpop.permute.xlu0 %1867
    %v1869 = vsel %vm1864, %v1866, %v1868
    %vm1870 = vcmp.le.s32.totalorder %v1474, 1
    %v1871 = vsel %vm1870, %v1780, %v1869
    %vm1872 = vcmp.eq.s32.totalorder %v1782, 1
    %v1873 = vsel %vm1872, 1, 0
    %1874 = vset.pattern.permute.xlu0 7
    %1875 = vperm.xlu0 %1874, %v1871
    %v1876 = vpop.permute.xlu0 %1875
    %v1877 = vmul.u32 %v1876, %v1873
    %v1878 = vadd.s32 %v1863, %v1877
    %vm1879 = vcmp.eq.s32.totalorder %v1871, 0
    %v1880 = vrot.slane %v1517, 7
    %v1881 = vsel %vm1525, %v1880, %v1516
    %v1882 = vrot.slane %v1521, 7
    %v1883 = vsel %vm1525, %v1882, %v1520
    %v1884 = vsel %vm1879, %v1881, %v1883
    %vm1885 = vcmp.le.s32.totalorder %v1474, 0
    %v1886 = vsel %vm1885, %v1780, %v1884
    %vm1887 = vcmp.eq.s32.totalorder %v1782, 0
    %v1888 = vsel %vm1887, 1, 0
    %1889 = vset.pattern.permute.xlu0 7
    %1890 = vperm.xlu0 %1889, %v1886
    %v1891 = vpop.permute.xlu0 %1890
    %v1892 = vmul.u32 %v1891, %v1888
    %v1893 = vadd.s32 %v1878, %v1892
    %1894 = vst.msk [vmem:[#allocation11] sm:$0x3] %vm1458, %v1893
    // Predicated region
    $region98: #{_decode_impl.1} parent=1 // pred_check
      _
    $region99: #{_decode_impl.1} parent=1 // pred_check_branch
      %1896 = sbr.rel (0) target = $region101
    $region100: #{_decode_impl.1} parent=1 // pred_region
      %s1898 = ssub.s32 32, 32
      %1899 = vsyncadd [#allocation4], %s1898
      %s1901 = sshll.u32 [#allocation11], 4
      %s1902 = int_to_ptr.vmem [resolvable:$true] %s1901
      %1904 = dma.vmem_to_hbm [thread:$0]  %s1902, 32, %s20, [#allocation4]
    $region101: #{_decode_impl.1} parent=1 // pred_fallthru
      _
    // Predicated region
    $region102: #{_decode_impl.1} parent=1 // pred_check
      _
    $region103: #{_decode_impl.1} parent=1 // pred_check_branch
      %1906 = sbr.rel (0) target = $region105
    $region104: #{_decode_impl.1} parent=1 // pred_region
      %1907 = dma.done [#allocation4], 32
    $region105: #{_decode_impl.1} parent=1 // pred_fallthru
      _
    %1908 = vsyncpa [#allocation4], 1
    %1909 = vsyncpa [#allocation5], 1
    %1910 = vsyncpa [#allocation7], 1
    %1911 = vsyncpa [#allocation10], 1

</llo_original>
